<compile_context>
chip_gen: v7x
topology: tpu7x:2x2x1
jax: 0.10.0
libtpu: 0.0.40
codegen_flags: <defaults>
</compile_context>

<pallas_src>
import jax
import jax.numpy as jnp
from jax.experimental import pallas as pl
from jax.experimental.pallas import tpu as pltpu

IN_DIM = 100
H1 = 256
H2 = 512
OUT_DIM = 28 * 28          # 784 (kept unpadded: full-dim output block, no un-pad copy)
IN_PAD = 128               # 100 -> 128 : lane-aligned K for the first matmul


def g_kernel(x_ref, w1_ref, b1_ref, w2_ref, b2_ref, w3_ref, b3_ref, o_ref):
    mm_dtype = w1_ref.dtype  # bf16 (default) or fp32; accumulation always fp32
    # Linear(100->256) + ReLU (bias-add/ReLU in fp32, down-cast fused into ReLU)
    h1 = jnp.dot(x_ref[...], w1_ref[...], preferred_element_type=jnp.float32)
    h1 = jnp.maximum(h1 + b1_ref[...], 0.0).astype(mm_dtype)
    # Linear(256->512) + ReLU
    h2 = jnp.dot(h1, w2_ref[...], preferred_element_type=jnp.float32)
    h2 = jnp.maximum(h2 + b2_ref[...], 0.0).astype(mm_dtype)
    # Linear(512->784) + Tanh (fp32 output)
    h3 = jnp.dot(h2, w3_ref[...], preferred_element_type=jnp.float32)
    o_ref[...] = jnp.tanh(h3 + b3_ref[...])


def _round_up(n, m):
    return ((n + m - 1) // m) * m


def _pad_to(a, axis, target):
    pad = target - a.shape[axis]
    if pad == 0:
        return a
    widths = [(0, 0)] * a.ndim
    widths[axis] = (0, pad)
    return jnp.pad(a, widths)


def prepare_params(params, *, use_bf16=True):
    """One-time pad/cast of the raw fp32 params (hoisted out of the call path)."""
    w1, b1, w2, b2, w3, b3 = params
    mm_dtype = jnp.bfloat16 if use_bf16 else jnp.float32
    w1p = _pad_to(w1, 0, IN_PAD).astype(mm_dtype)      # (128, 256), zero-padded K
    w2p = w2.astype(mm_dtype)                          # (256, 512)
    w3p = w3.astype(mm_dtype)                          # (512, 784)
    # biases stay fp32: bias-add / ReLU / tanh run in fp32
    return (w1p, b1.astype(jnp.float32), w2p, b2.astype(jnp.float32),
            w3p, b3.astype(jnp.float32))


def generator_forward(x, prepared_params, *, tile_b=512):
    """x: (B, 100) float32, prepared_params from prepare_params() -> (B, 28, 28) f32."""
    w1p, b1, w2p, b2, w3p, b3 = prepared_params
    mm_dtype = w1p.dtype
    B = x.shape[0]

    # cast x to the matmul dtype and zero-pad K 100 -> 128 (numerically inert)
    xp = _pad_to(x.astype(mm_dtype), 1, IN_PAD)        # (B, 128)

    # --- batch tiling: big MXU-filling tiles; keep >= 2 tiles when B allows ---
    tb = max(8, min(tile_b, _round_up(B, 8)))
    tb = (tb // 8) * 8
    if B > 8 and _round_up(B, tb) // tb < 2:
        tb = _round_up(-(-B // 2), 8)                  # split batch across >= 2 tiles (v7x megacore)
    Bp = _round_up(B, tb)
    xp = _pad_to(xp, 0, Bp)
    grid = (Bp // tb,)

    # --- VMEM budget estimate (set a limit only when the default would be tight) ---
    wbytes = mm_dtype.itemsize
    weight_bytes = (IN_PAD * H1 + H1 * H2 + H2 * OUT_DIM) * wbytes + (H1 + H2 + OUT_DIM) * 4
    io_bytes = 2 * (tb * IN_PAD * wbytes + tb * OUT_DIM * 4)          # double-buffered x/out
    inter_bytes = tb * (H1 + H2) * (4 + wbytes) + tb * OUT_DIM * 4    # h1/h2 (f32+mm) + h3 (f32)
    est = weight_bytes + io_bytes + inter_bytes
    vmem_limit = None
    if est > 12 * 1024 * 1024:
        vmem_limit = min(est + 4 * 1024 * 1024, 32 * 1024 * 1024)

    # Resident (constant index_map) weights/biases: single-buffered — fetched
    # once, never re-DMA'd, so double-buffering would only waste VMEM.
    def res(shape):
        return pl.BlockSpec(shape, lambda i: (0, 0),
                            pipeline_mode=pl.Buffered(1))

    out_flat = pl.pallas_call(
        g_kernel,
        out_shape=jax.ShapeDtypeStruct((Bp, OUT_DIM), jnp.float32),
        grid_spec=pltpu.PrefetchScalarGridSpec(
            num_scalar_prefetch=0,
            grid=grid,
            in_specs=[
                pl.BlockSpec((tb, IN_PAD), lambda i: (i, 0)),   # x tile
                res((IN_PAD, H1)),                              # w1 (resident)
                res((1, H1)),                                   # b1
                res((H1, H2)),                                  # w2
                res((1, H2)),                                   # b2
                res((H2, OUT_DIM)),                             # w3
                res((1, OUT_DIM)),                              # b3
            ],
            out_specs=pl.BlockSpec((tb, OUT_DIM), lambda i: (i, 0)),
        ),
        compiler_params=pltpu.CompilerParams(
            dimension_semantics=("parallel",),
            vmem_limit_bytes=vmem_limit,
        ),
    )(xp, w1p, b1, w2p, b2, w3p, b3)

    if Bp != B:
        out_flat = out_flat[:B]        # only when batch needed padding
    return out_flat.reshape(-1, 28, 28)


def init_params(key):
    """Deterministic init matching nn.Linear shapes (stored transposed, fp32)."""
    ks = jax.random.split(key, 6)

    def linear(kw, kb, fan_in, fan_out):
        bound = 1.0 / jnp.sqrt(fan_in)
        w = jax.random.uniform(kw, (fan_in, fan_out), jnp.float32, -bound, bound)
        b = jax.random.uniform(kb, (1, fan_out), jnp.float32, -bound, bound)
        return w, b

    w1, b1 = linear(ks[0], ks[1], IN_DIM, H1)
    w2, b2 = linear(ks[2], ks[3], H1, H2)
    w3, b3 = linear(ks[4], ks[5], H2, OUT_DIM)
    return (w1, b1, w2, b2, w3, b3)


def generator_ref(x, params):
    w1, b1, w2, b2, w3, b3 = params
    h = jnp.maximum(x @ w1 + b1, 0.0)
    h = jnp.maximum(h @ w2 + b2, 0.0)
    h = jnp.tanh(h @ w3 + b3)
    return h.reshape(-1, 28, 28)


if __name__ == "__main__":
    key = jax.random.PRNGKey(0)
    kp, kx = jax.random.split(key)
    params = init_params(kp)

    B = 8
    x = jax.random.normal(kx, (B, IN_DIM), dtype=jnp.float32)
    ref = generator_ref(x, params)

    # fp32-operand path: must match the reference tightly.
    p_fp32 = prepare_params(params, use_bf16=False)
    img_fp32 = jax.block_until_ready(generator_forward(x, p_fp32))
    assert img_fp32.shape == (B, 28, 28), img_fp32.shape
    assert jnp.allclose(img_fp32, ref, atol=1e-5, rtol=1e-5), "fp32 mismatch vs reference"

    # default bf16-operand / fp32-accumulation path (MXU-friendly on v6e/v7x).
    p_bf16 = prepare_params(params)
    img = jax.block_until_ready(generator_forward(x, p_bf16))
    assert img.shape == (B, 28, 28), img.shape
    assert jnp.allclose(img, ref, atol=3e-2, rtol=0.0), "bf16 mismatch vs reference"

    # exercise the multi-tile path (>=2 grid tiles + ragged batch padding)
    B2 = 20
    x2 = jax.random.normal(kx, (B2, IN_DIM), dtype=jnp.float32)
    ref2 = generator_ref(x2, params)
    img2 = jax.block_until_ready(generator_forward(x2, p_bf16))
    assert img2.shape == (B2, 28, 28), img2.shape
    assert jnp.allclose(img2, ref2, atol=3e-2, rtol=0.0), "multi-tile bf16 mismatch"

    print("KERNEL_OK")
</pallas_src>

<mosaic_0001>
module attributes {stable_mosaic.version = 11 : i64} {
  func.func @g_kernel(%arg0: i32, %arg1: memref<8x128xf32, #tpu.memory_space<vmem>>, %arg2: memref<128x256xf32, #tpu.memory_space<vmem>>, %arg3: memref<1x256xf32, #tpu.memory_space<vmem>>, %arg4: memref<256x512xf32, #tpu.memory_space<vmem>>, %arg5: memref<1x512xf32, #tpu.memory_space<vmem>>, %arg6: memref<512x784xf32, #tpu.memory_space<vmem>>, %arg7: memref<1x784xf32, #tpu.memory_space<vmem>>, %arg8: memref<8x784xf32, #tpu.memory_space<vmem>>) attributes {dimension_semantics = [#tpu.dimension_semantics<parallel>], iteration_bounds = array<i64: 1>, scalar_prefetch = 0 : i64, scratch_operands = 0 : i64, tpu.core_type = #tpu.core_type<tc>, window_params = [{transform_indices = @transform_0, window_bounds = array<i64: 8, 128>}, {pipeline_mode = #tpu.pipeline_mode<synchronous>, transform_indices = @transform_1, window_bounds = array<i64: 128, 256>}, {pipeline_mode = #tpu.pipeline_mode<synchronous>, transform_indices = @transform_2, window_bounds = array<i64: 1, 256>}, {pipeline_mode = #tpu.pipeline_mode<synchronous>, transform_indices = @transform_3, window_bounds = array<i64: 256, 512>}, {pipeline_mode = #tpu.pipeline_mode<synchronous>, transform_indices = @transform_4, window_bounds = array<i64: 1, 512>}, {pipeline_mode = #tpu.pipeline_mode<synchronous>, transform_indices = @transform_5, window_bounds = array<i64: 512, 784>}, {pipeline_mode = #tpu.pipeline_mode<synchronous>, transform_indices = @transform_6, window_bounds = array<i64: 1, 784>}, {transform_indices = @transform_7, window_bounds = array<i64: 8, 784>}]} {
    %c0 = arith.constant 0 : index
    %c0_0 = arith.constant 0 : index
    %0 = vector.load %arg1[%c0, %c0_0] : memref<8x128xf32, #tpu.memory_space<vmem>>, vector<8x128xf32>
    %c0_1 = arith.constant 0 : index
    %c0_2 = arith.constant 0 : index
    %1 = vector.load %arg2[%c0_1, %c0_2] : memref<128x256xf32, #tpu.memory_space<vmem>>, vector<128x256xf32>
    %cst = arith.constant dense<0.000000e+00> : vector<8x256xf32>
    %2 = tpu.matmul %0, %1, %cst {dimension_numbers = #tpu.dot_dimension_numbers<[1], [0], [0], [1], [0, 0, 1, 1], [], []>} : vector<8x128xf32>, vector<128x256xf32>, vector<8x256xf32> -> vector<8x256xf32>
    %c0_3 = arith.constant 0 : index
    %c0_4 = arith.constant 0 : index
    %3 = vector.load %arg3[%c0_3, %c0_4] : memref<1x256xf32, #tpu.memory_space<vmem>>, vector<1x256xf32>
    %4 = vector.broadcast %3 : vector<1x256xf32> to vector<8x256xf32>
    %5 = arith.addf %2, %4 : vector<8x256xf32>
    %cst_5 = arith.constant 0.000000e+00 : f32
    %6 = vector.broadcast %cst_5 : f32 to vector<8x256xf32>
    %7 = arith.maximumf %5, %6 : vector<8x256xf32>
    %c0_6 = arith.constant 0 : index
    %c0_7 = arith.constant 0 : index
    %8 = vector.load %arg4[%c0_6, %c0_7] : memref<256x512xf32, #tpu.memory_space<vmem>>, vector<256x512xf32>
    %cst_8 = arith.constant dense<0.000000e+00> : vector<8x512xf32>
    %9 = tpu.matmul %7, %8, %cst_8 {dimension_numbers = #tpu.dot_dimension_numbers<[1], [0], [0], [1], [0, 0, 1, 1], [], []>} : vector<8x256xf32>, vector<256x512xf32>, vector<8x512xf32> -> vector<8x512xf32>
    %c0_9 = arith.constant 0 : index
    %c0_10 = arith.constant 0 : index
    %10 = vector.load %arg5[%c0_9, %c0_10] : memref<1x512xf32, #tpu.memory_space<vmem>>, vector<1x512xf32>
    %11 = vector.broadcast %10 : vector<1x512xf32> to vector<8x512xf32>
    %12 = arith.addf %9, %11 : vector<8x512xf32>
    %cst_11 = arith.constant 0.000000e+00 : f32
    %13 = vector.broadcast %cst_11 : f32 to vector<8x512xf32>
    %14 = arith.maximumf %12, %13 : vector<8x512xf32>
    %c0_12 = arith.constant 0 : index
    %c0_13 = arith.constant 0 : index
    %15 = vector.load %arg6[%c0_12, %c0_13] : memref<512x784xf32, #tpu.memory_space<vmem>>, vector<512x784xf32>
    %cst_14 = arith.constant dense<0.000000e+00> : vector<8x784xf32>
    %16 = tpu.matmul %14, %15, %cst_14 {dimension_numbers = #tpu.dot_dimension_numbers<[1], [0], [0], [1], [0, 0, 1, 1], [], []>} : vector<8x512xf32>, vector<512x784xf32>, vector<8x784xf32> -> vector<8x784xf32>
    %c0_15 = arith.constant 0 : index
    %c0_16 = arith.constant 0 : index
    %17 = vector.load %arg7[%c0_15, %c0_16] : memref<1x784xf32, #tpu.memory_space<vmem>>, vector<1x784xf32>
    %18 = vector.broadcast %17 : vector<1x784xf32> to vector<8x784xf32>
    %19 = arith.addf %16, %18 : vector<8x784xf32>
    %20 = math.tanh %19 : vector<8x784xf32>
    %c0_17 = arith.constant 0 : index
    %c0_18 = arith.constant 0 : index
    %21 = vector.load %arg8[%c0_17, %c0_18] : memref<8x784xf32, #tpu.memory_space<vmem>>, vector<8x784xf32>
    tpu.vector_store %arg8[%c0_17, %c0_18], %20 {strides = array<i32>} : memref<8x784xf32, #tpu.memory_space<vmem>>, vector<8x784xf32>,
    return
  }
  func.func @transform_0(%arg0: i32) -> (i32, i32) {
    %c0_i32 = arith.constant 0 : i32
    %c0_i32_0 = arith.constant 0 : i32
    return %arg0, %c0_i32 : i32, i32
  }
  func.func @transform_1(%arg0: i32) -> (i32, i32) {
    %c0_i32 = arith.constant 0 : i32
    %c0_i32_0 = arith.constant 0 : i32
    %c0_i32_1 = arith.constant 0 : i32
    return %c0_i32, %c0_i32_0 : i32, i32
  }
  func.func @transform_2(%arg0: i32) -> (i32, i32) {
    %c0_i32 = arith.constant 0 : i32
    %c0_i32_0 = arith.constant 0 : i32
    %c0_i32_1 = arith.constant 0 : i32
    return %c0_i32, %c0_i32_0 : i32, i32
  }
  func.func @transform_3(%arg0: i32) -> (i32, i32) {
    %c0_i32 = arith.constant 0 : i32
    %c0_i32_0 = arith.constant 0 : i32
    %c0_i32_1 = arith.constant 0 : i32
    return %c0_i32, %c0_i32_0 : i32, i32
  }
  func.func @transform_4(%arg0: i32) -> (i32, i32) {
    %c0_i32 = arith.constant 0 : i32
    %c0_i32_0 = arith.constant 0 : i32
    %c0_i32_1 = arith.constant 0 : i32
    return %c0_i32, %c0_i32_0 : i32, i32
  }
  func.func @transform_5(%arg0: i32) -> (i32, i32) {
    %c0_i32 = arith.constant 0 : i32
    %c0_i32_0 = arith.constant 0 : i32
    %c0_i32_1 = arith.constant 0 : i32
    return %c0_i32, %c0_i32_0 : i32, i32
  }
  func.func @transform_6(%arg0: i32) -> (i32, i32) {
    %c0_i32 = arith.constant 0 : i32
    %c0_i32_0 = arith.constant 0 : i32
    %c0_i32_1 = arith.constant 0 : i32
    return %c0_i32, %c0_i32_0 : i32, i32
  }
  func.func @transform_7(%arg0: i32) -> (i32, i32) {
    %c0_i32 = arith.constant 0 : i32
    %c0_i32_0 = arith.constant 0 : i32
    return %arg0, %c0_i32 : i32, i32
  }
}

</mosaic_0001>

<llo_original>
// kernel: tpu_custom_call.1
$region0: #{tpu_custom_call.1}
  #allocation0 [shape = 'u32[]', space=smem, size = 0x4, offset = 0x4, fixed_abs, tag = 'smem constant byte address 0x4 - core index']
  #allocation1 [shape = 'u32[144,128]{1,0:T(1,128)}', space=vmem, size = 0x12000, scoped, tag = 'internal scratch']
  %s0 = inlined_call_operand.vmem [shape: f32[8,128], index: 0, kind: input, shape index: {}]
  %s1 = inlined_call_operand.vmem [shape: f32[128,256], index: 1, kind: input, shape index: {}]
  %s2 = inlined_call_operand.vmem [shape: f32[1,256], index: 2, kind: input, shape index: {}]
  %s3 = inlined_call_operand.vmem [shape: f32[256,512], index: 3, kind: input, shape index: {}]
  %s4 = inlined_call_operand.vmem [shape: f32[1,512], index: 4, kind: input, shape index: {}]
  %s5 = inlined_call_operand.vmem [shape: f32[512,784], index: 5, kind: input, shape index: {}]
  %s6 = inlined_call_operand.vmem [shape: f32[1,784], index: 6, kind: input, shape index: {}]
  %s7 = inlined_call_operand.hbm [shape: f32[8,784], index: 7, kind: output, shape index: {}]
  %s8 = sld [smem:[#allocation0]]
  $region38: #{tpu_custom_call.1} parent=0
    _
  %s10 = ssub.s32 1, %s8
  %s11 = scalar_select 0, %s10, %s8
  $region1: #{tpu_custom_call.1} parent=0
    #allocation2 [shape = 'u8[28672]{0}', space=vmem, size = 0x7000, scoped, tag = 'output window, operand 0, single buffered']
    #allocation3 [shape = 's32[1]{0}', space=sflag, size = 0x4, scoped, tag = 'scoped memory for tpu_custom_call.1']
    %12 = vsyncpa [#allocation3], 0
    // Predicated region
    $region2: #{tpu_custom_call.1} parent=1 // pred_check
      _
    $region3: #{tpu_custom_call.1} parent=1 // pred_check_branch
      %14 = sbr.rel (0) target = $region5
    $region4: #{tpu_custom_call.1} parent=1 // pred_region
      _
    $region5: #{tpu_custom_call.1} parent=1 // pred_fallthru
      _
    // Predicated region
    $region6: #{tpu_custom_call.1} parent=1 // pred_check
      _
    $region7: #{tpu_custom_call.1} parent=1 // pred_check_branch
      %16 = sbr.rel (0) target = $region9
    $region8: #{tpu_custom_call.1} parent=1 // pred_region
      _
    $region9: #{tpu_custom_call.1} parent=1 // pred_fallthru
      _
    // Predicated region
    $region10: #{tpu_custom_call.1} parent=1 // pred_check
      _
    $region11: #{tpu_custom_call.1} parent=1 // pred_check_branch
      %18 = sbr.rel (0) target = $region13
    $region12: #{tpu_custom_call.1} parent=1 // pred_region
      _
    $region13: #{tpu_custom_call.1} parent=1 // pred_fallthru
      _
    // Predicated region
    $region14: #{tpu_custom_call.1} parent=1 // pred_check
      _
    $region15: #{tpu_custom_call.1} parent=1 // pred_check_branch
      %20 = sbr.rel (0) target = $region17
    $region16: #{tpu_custom_call.1} parent=1 // pred_region
      _
    $region17: #{tpu_custom_call.1} parent=1 // pred_fallthru
      _
    // Predicated region
    $region18: #{tpu_custom_call.1} parent=1 // pred_check
      _
    $region19: #{tpu_custom_call.1} parent=1 // pred_check_branch
      %22 = sbr.rel (0) target = $region21
    $region20: #{tpu_custom_call.1} parent=1 // pred_region
      _
    $region21: #{tpu_custom_call.1} parent=1 // pred_fallthru
      _
    // Predicated region
    $region22: #{tpu_custom_call.1} parent=1 // pred_check
      _
    $region23: #{tpu_custom_call.1} parent=1 // pred_check_branch
      %24 = sbr.rel (0) target = $region25
    $region24: #{tpu_custom_call.1} parent=1 // pred_region
      _
    $region25: #{tpu_custom_call.1} parent=1 // pred_fallthru
      _
    // Predicated region
    $region26: #{tpu_custom_call.1} parent=1 // pred_check
      _
    $region27: #{tpu_custom_call.1} parent=1 // pred_check_branch
      %26 = sbr.rel (0) target = $region29
    $region28: #{tpu_custom_call.1} parent=1 // pred_region
      _
    $region29: #{tpu_custom_call.1} parent=1 // pred_fallthru
      _
    %v27 = vld [vmem:[%s0] sm:$0xff]
    %v28 = vld [vmem:[%s1] sm:$0xff]
    %v29 = vld [vmem:[%s1 + $0x8] sm:$0xff]
    %v30 = vld [vmem:[%s1 + $0x10] sm:$0xff]
    %v31 = vld [vmem:[%s1 + $0x18] sm:$0xff]
    %v32 = vld [vmem:[%s1 + $0x20] sm:$0xff]
    %v33 = vld [vmem:[%s1 + $0x28] sm:$0xff]
    %v34 = vld [vmem:[%s1 + $0x30] sm:$0xff]
    %v35 = vld [vmem:[%s1 + $0x38] sm:$0xff]
    %v36 = vld [vmem:[%s1 + $0x40] sm:$0xff]
    %v37 = vld [vmem:[%s1 + $0x48] sm:$0xff]
    %v38 = vld [vmem:[%s1 + $0x50] sm:$0xff]
    %v39 = vld [vmem:[%s1 + $0x58] sm:$0xff]
    %v40 = vld [vmem:[%s1 + $0x60] sm:$0xff]
    %v41 = vld [vmem:[%s1 + $0x68] sm:$0xff]
    %v42 = vld [vmem:[%s1 + $0x70] sm:$0xff]
    %v43 = vld [vmem:[%s1 + $0x78] sm:$0xff]
    %v44 = vld [vmem:[%s1 + $0x80] sm:$0xff]
    %v45 = vld [vmem:[%s1 + $0x88] sm:$0xff]
    %v46 = vld [vmem:[%s1 + $0x90] sm:$0xff]
    %v47 = vld [vmem:[%s1 + $0x98] sm:$0xff]
    %v48 = vld [vmem:[%s1 + $0xa0] sm:$0xff]
    %v49 = vld [vmem:[%s1 + $0xa8] sm:$0xff]
    %v50 = vld [vmem:[%s1 + $0xb0] sm:$0xff]
    %v51 = vld [vmem:[%s1 + $0xb8] sm:$0xff]
    %v52 = vld [vmem:[%s1 + $0xc0] sm:$0xff]
    %v53 = vld [vmem:[%s1 + $0xc8] sm:$0xff]
    %v54 = vld [vmem:[%s1 + $0xd0] sm:$0xff]
    %v55 = vld [vmem:[%s1 + $0xd8] sm:$0xff]
    %v56 = vld [vmem:[%s1 + $0xe0] sm:$0xff]
    %v57 = vld [vmem:[%s1 + $0xe8] sm:$0xff]
    %v58 = vld [vmem:[%s1 + $0xf0] sm:$0xff]
    %v59 = vld [vmem:[%s1 + $0xf8] sm:$0xff]
    %v60 = vld [vmem:[%s2] sm:$0x3]
    %v62 = vlaneseq
    %v63 = vshrl.u32 %v62, 7
    %v64 = vsub.s32 0, %v63
    %v65 = vrot.slane %v60, %v64
    %v66 = vlaneseq
    %v67 = vshrl.u32 %v66, 7
    %v68 = vsub.s32 1, %v67
    %v69 = vrot.slane %v60, %v68
    %72 = vmatprep.subr.mxu0 %v29
    %73 = vmatpush1.msra.mxu0 %v28
    %74 = vmatprep.subr.mxu0 %v31
    %75 = vmatpush1.msra.mxu0 %v30
    %76 = vmatprep.subr.mxu0 %v33
    %77 = vmatpush1.msra.mxu0 %v32
    %78 = vmatprep.subr.mxu0 %v35
    %79 = vmatpush1.msra.mxu0 %v34
    %80 = vmatprep.subr.mxu0 %v37
    %81 = vmatpush1.msra.mxu0 %v36
    %82 = vmatprep.subr.mxu0 %v39
    %83 = vmatpush1.msra.mxu0 %v38
    %84 = vmatprep.subr.mxu0 %v41
    %85 = vmatpush1.msra.mxu0 %v40
    %86 = vmatprep.subr.mxu0 %v43
    %87 = vmatpush1.msra.mxu0 %v42
    %88 = vmatprep.subr.mxu0 %v45
    %89 = vmatpush1.msra.mxu0 %v44
    %90 = vmatprep.subr.mxu0 %v47
    %91 = vmatpush1.msra.mxu0 %v46
    %92 = vmatprep.subr.mxu0 %v49
    %93 = vmatpush1.msra.mxu0 %v48
    %94 = vmatprep.subr.mxu0 %v51
    %95 = vmatpush1.msra.mxu0 %v50
    %96 = vmatprep.subr.mxu0 %v53
    %97 = vmatpush1.msra.mxu0 %v52
    %98 = vmatprep.subr.mxu0 %v55
    %99 = vmatpush1.msra.mxu0 %v54
    %100 = vmatprep.subr.mxu0 %v57
    %101 = vmatpush1.msra.mxu0 %v56
    %102 = vmatprep.subr.mxu0 %v59
    %103 = vmatpush1.msra.mxu0 %v58
    %104 = vmatprep.subr.mxu0 0.0
    %105 = vmatpush1.msra.mxu0 0.0
    %106 = vmatprep.subr.mxu0 0.0
    %107 = vmatpush1.msra.mxu0 0.0
    %108 = vmatprep.subr.mxu0 0.0
    %109 = vmatpush1.msra.mxu0 0.0
    %110 = vmatprep.subr.mxu0 0.0
    %111 = vmatpush1.msra.mxu0 0.0
    %112 = vmatprep.subr.mxu0 0.0
    %113 = vmatpush1.msra.mxu0 0.0
    %114 = vmatprep.subr.mxu0 0.0
    %115 = vmatpush1.msra.mxu0 0.0
    %116 = vmatprep.subr.mxu0 0.0
    %117 = vmatpush1.msra.mxu0 0.0
    %118 = vmatprep.subr.mxu0 0.0
    %119 = vmatpush1.msra.mxu0 0.0
    %120 = vmatprep.subr.mxu0 0.0
    %121 = vmatpush1.msra.mxu0 0.0
    %122 = vmatprep.subr.mxu0 0.0
    %123 = vmatpush1.msra.mxu0 0.0
    %124 = vmatprep.subr.mxu0 0.0
    %125 = vmatpush1.msra.mxu0 0.0
    %126 = vmatprep.subr.mxu0 0.0
    %127 = vmatpush1.msra.mxu0 0.0
    %128 = vmatprep.subr.mxu0 0.0
    %129 = vmatpush1.msra.mxu0 0.0
    %130 = vmatprep.subr.mxu0 0.0
    %131 = vmatpush1.msra.mxu0 0.0
    %132 = vmatprep.subr.mxu0 0.0
    %133 = vmatpush1.msra.mxu0 0.0
    %134 = vmatprep.subr.mxu0 0.0
    %135 = vmatpush1.msra.mxu0 0.0
    %136 = vmatprep.mubr.f32.mxu0 0.0
    %137 = vmatmul.mubr.f32.gmra.mrb[0].mxu0 %v27
    %v138 = vpop.f32.mrb[0].mxu0
    %v139 = vadd.f32 %v65, %v138
    %v140 = vpop.f32.mrb[0].mxu0
    %v141 = vadd.f32 %v69, %v140
    %142 = vdwg.mxu0
    %v143 = vmax.f32 %v139, 0.0
    %v144 = vmax.f32 %v141, 0.0
    %v145 = vld [vmem:[%s3] sm:$0xff]
    %v146 = vld [vmem:[%s3 + $0x8] sm:$0xff]
    %v147 = vld [vmem:[%s3 + $0x10] sm:$0xff]
    %v148 = vld [vmem:[%s3 + $0x18] sm:$0xff]
    %v149 = vld [vmem:[%s3 + $0x20] sm:$0xff]
    %v150 = vld [vmem:[%s3 + $0x28] sm:$0xff]
    %v151 = vld [vmem:[%s3 + $0x30] sm:$0xff]
    %v152 = vld [vmem:[%s3 + $0x38] sm:$0xff]
    %v153 = vld [vmem:[%s3 + $0x40] sm:$0xff]
    %v154 = vld [vmem:[%s3 + $0x48] sm:$0xff]
    %v155 = vld [vmem:[%s3 + $0x50] sm:$0xff]
    %v156 = vld [vmem:[%s3 + $0x58] sm:$0xff]
    %v157 = vld [vmem:[%s3 + $0x60] sm:$0xff]
    %v158 = vld [vmem:[%s3 + $0x68] sm:$0xff]
    %v159 = vld [vmem:[%s3 + $0x70] sm:$0xff]
    %v160 = vld [vmem:[%s3 + $0x78] sm:$0xff]
    %v161 = vld [vmem:[%s3 + $0x80] sm:$0xff]
    %v162 = vld [vmem:[%s3 + $0x88] sm:$0xff]
    %v163 = vld [vmem:[%s3 + $0x90] sm:$0xff]
    %v164 = vld [vmem:[%s3 + $0x98] sm:$0xff]
    %v165 = vld [vmem:[%s3 + $0xa0] sm:$0xff]
    %v166 = vld [vmem:[%s3 + $0xa8] sm:$0xff]
    %v167 = vld [vmem:[%s3 + $0xb0] sm:$0xff]
    %v168 = vld [vmem:[%s3 + $0xb8] sm:$0xff]
    %v169 = vld [vmem:[%s3 + $0xc0] sm:$0xff]
    %v170 = vld [vmem:[%s3 + $0xc8] sm:$0xff]
    %v171 = vld [vmem:[%s3 + $0xd0] sm:$0xff]
    %v172 = vld [vmem:[%s3 + $0xd8] sm:$0xff]
    %v173 = vld [vmem:[%s3 + $0xe0] sm:$0xff]
    %v174 = vld [vmem:[%s3 + $0xe8] sm:$0xff]
    %v175 = vld [vmem:[%s3 + $0xf0] sm:$0xff]
    %v176 = vld [vmem:[%s3 + $0xf8] sm:$0xff]
    %v177 = vld [vmem:[%s3 + $0x100] sm:$0xff]
    %v178 = vld [vmem:[%s3 + $0x108] sm:$0xff]
    %v179 = vld [vmem:[%s3 + $0x110] sm:$0xff]
    %v180 = vld [vmem:[%s3 + $0x118] sm:$0xff]
    %v181 = vld [vmem:[%s3 + $0x120] sm:$0xff]
    %v182 = vld [vmem:[%s3 + $0x128] sm:$0xff]
    %v183 = vld [vmem:[%s3 + $0x130] sm:$0xff]
    %v184 = vld [vmem:[%s3 + $0x138] sm:$0xff]
    %v185 = vld [vmem:[%s3 + $0x140] sm:$0xff]
    %v186 = vld [vmem:[%s3 + $0x148] sm:$0xff]
    %v187 = vld [vmem:[%s3 + $0x150] sm:$0xff]
    %v188 = vld [vmem:[%s3 + $0x158] sm:$0xff]
    %v189 = vld [vmem:[%s3 + $0x160] sm:$0xff]
    %v190 = vld [vmem:[%s3 + $0x168] sm:$0xff]
    %v191 = vld [vmem:[%s3 + $0x170] sm:$0xff]
    %v192 = vld [vmem:[%s3 + $0x178] sm:$0xff]
    %v193 = vld [vmem:[%s3 + $0x180] sm:$0xff]
    %v194 = vld [vmem:[%s3 + $0x188] sm:$0xff]
    %v195 = vld [vmem:[%s3 + $0x190] sm:$0xff]
    %v196 = vld [vmem:[%s3 + $0x198] sm:$0xff]
    %v197 = vld [vmem:[%s3 + $0x1a0] sm:$0xff]
    %v198 = vld [vmem:[%s3 + $0x1a8] sm:$0xff]
    %v199 = vld [vmem:[%s3 + $0x1b0] sm:$0xff]
    %v200 = vld [vmem:[%s3 + $0x1b8] sm:$0xff]
    %v201 = vld [vmem:[%s3 + $0x1c0] sm:$0xff]
    %v202 = vld [vmem:[%s3 + $0x1c8] sm:$0xff]
    %v203 = vld [vmem:[%s3 + $0x1d0] sm:$0xff]
    %v204 = vld [vmem:[%s3 + $0x1d8] sm:$0xff]
    %v205 = vld [vmem:[%s3 + $0x1e0] sm:$0xff]
    %v206 = vld [vmem:[%s3 + $0x1e8] sm:$0xff]
    %v207 = vld [vmem:[%s3 + $0x1f0] sm:$0xff]
    %v208 = vld [vmem:[%s3 + $0x1f8] sm:$0xff]
    %v209 = vld [vmem:[%s3 + $0x200] sm:$0xff]
    %v210 = vld [vmem:[%s3 + $0x208] sm:$0xff]
    %v211 = vld [vmem:[%s3 + $0x210] sm:$0xff]
    %v212 = vld [vmem:[%s3 + $0x218] sm:$0xff]
    %v213 = vld [vmem:[%s3 + $0x220] sm:$0xff]
    %v214 = vld [vmem:[%s3 + $0x228] sm:$0xff]
    %v215 = vld [vmem:[%s3 + $0x230] sm:$0xff]
    %v216 = vld [vmem:[%s3 + $0x238] sm:$0xff]
    %v217 = vld [vmem:[%s3 + $0x240] sm:$0xff]
    %v218 = vld [vmem:[%s3 + $0x248] sm:$0xff]
    %v219 = vld [vmem:[%s3 + $0x250] sm:$0xff]
    %v220 = vld [vmem:[%s3 + $0x258] sm:$0xff]
    %v221 = vld [vmem:[%s3 + $0x260] sm:$0xff]
    %v222 = vld [vmem:[%s3 + $0x268] sm:$0xff]
    %v223 = vld [vmem:[%s3 + $0x270] sm:$0xff]
    %v224 = vld [vmem:[%s3 + $0x278] sm:$0xff]
    %v225 = vld [vmem:[%s3 + $0x280] sm:$0xff]
    %v226 = vld [vmem:[%s3 + $0x288] sm:$0xff]
    %v227 = vld [vmem:[%s3 + $0x290] sm:$0xff]
    %v228 = vld [vmem:[%s3 + $0x298] sm:$0xff]
    %v229 = vld [vmem:[%s3 + $0x2a0] sm:$0xff]
    %v230 = vld [vmem:[%s3 + $0x2a8] sm:$0xff]
    %v231 = vld [vmem:[%s3 + $0x2b0] sm:$0xff]
    %v232 = vld [vmem:[%s3 + $0x2b8] sm:$0xff]
    %v233 = vld [vmem:[%s3 + $0x2c0] sm:$0xff]
    %v234 = vld [vmem:[%s3 + $0x2c8] sm:$0xff]
    %v235 = vld [vmem:[%s3 + $0x2d0] sm:$0xff]
    %v236 = vld [vmem:[%s3 + $0x2d8] sm:$0xff]
    %v237 = vld [vmem:[%s3 + $0x2e0] sm:$0xff]
    %v238 = vld [vmem:[%s3 + $0x2e8] sm:$0xff]
    %v239 = vld [vmem:[%s3 + $0x2f0] sm:$0xff]
    %v240 = vld [vmem:[%s3 + $0x2f8] sm:$0xff]
    %v241 = vld [vmem:[%s3 + $0x300] sm:$0xff]
    %v242 = vld [vmem:[%s3 + $0x308] sm:$0xff]
    %v243 = vld [vmem:[%s3 + $0x310] sm:$0xff]
    %v244 = vld [vmem:[%s3 + $0x318] sm:$0xff]
    %v245 = vld [vmem:[%s3 + $0x320] sm:$0xff]
    %v246 = vld [vmem:[%s3 + $0x328] sm:$0xff]
    %v247 = vld [vmem:[%s3 + $0x330] sm:$0xff]
    %v248 = vld [vmem:[%s3 + $0x338] sm:$0xff]
    %v249 = vld [vmem:[%s3 + $0x340] sm:$0xff]
    %v250 = vld [vmem:[%s3 + $0x348] sm:$0xff]
    %v251 = vld [vmem:[%s3 + $0x350] sm:$0xff]
    %v252 = vld [vmem:[%s3 + $0x358] sm:$0xff]
    %v253 = vld [vmem:[%s3 + $0x360] sm:$0xff]
    %v254 = vld [vmem:[%s3 + $0x368] sm:$0xff]
    %v255 = vld [vmem:[%s3 + $0x370] sm:$0xff]
    %v256 = vld [vmem:[%s3 + $0x378] sm:$0xff]
    %v257 = vld [vmem:[%s3 + $0x380] sm:$0xff]
    %v258 = vld [vmem:[%s3 + $0x388] sm:$0xff]
    %v259 = vld [vmem:[%s3 + $0x390] sm:$0xff]
    %v260 = vld [vmem:[%s3 + $0x398] sm:$0xff]
    %v261 = vld [vmem:[%s3 + $0x3a0] sm:$0xff]
    %v262 = vld [vmem:[%s3 + $0x3a8] sm:$0xff]
    %v263 = vld [vmem:[%s3 + $0x3b0] sm:$0xff]
    %v264 = vld [vmem:[%s3 + $0x3b8] sm:$0xff]
    %v265 = vld [vmem:[%s3 + $0x3c0] sm:$0xff]
    %v266 = vld [vmem:[%s3 + $0x3c8] sm:$0xff]
    %v267 = vld [vmem:[%s3 + $0x3d0] sm:$0xff]
    %v268 = vld [vmem:[%s3 + $0x3d8] sm:$0xff]
    %v269 = vld [vmem:[%s3 + $0x3e0] sm:$0xff]
    %v270 = vld [vmem:[%s3 + $0x3e8] sm:$0xff]
    %v271 = vld [vmem:[%s3 + $0x3f0] sm:$0xff]
    %v272 = vld [vmem:[%s3 + $0x3f8] sm:$0xff]
    %v273 = vld [vmem:[%s4] sm:$0xf]
    %v275 = vlaneseq
    %v276 = vshrl.u32 %v275, 7
    %v277 = vsub.s32 0, %v276
    %v278 = vrot.slane %v273, %v277
    %v279 = vlaneseq
    %v280 = vshrl.u32 %v279, 7
    %v281 = vsub.s32 1, %v280
    %v282 = vrot.slane %v273, %v281
    %v283 = vlaneseq
    %v284 = vshrl.u32 %v283, 7
    %v285 = vsub.s32 2, %v284
    %v286 = vrot.slane %v273, %v285
    %v287 = vlaneseq
    %v288 = vshrl.u32 %v287, 7
    %v289 = vsub.s32 3, %v288
    %v290 = vrot.slane %v273, %v289
    %295 = vmatprep.subr.mxu0 %v146
    %296 = vmatpush1.msra.mxu0 %v145
    %297 = vmatprep.subr.mxu0 %v150
    %298 = vmatpush1.msra.mxu0 %v149
    %299 = vmatprep.subr.mxu0 %v154
    %300 = vmatpush1.msra.mxu0 %v153
    %301 = vmatprep.subr.mxu0 %v158
    %302 = vmatpush1.msra.mxu0 %v157
    %303 = vmatprep.subr.mxu0 %v162
    %304 = vmatpush1.msra.mxu0 %v161
    %305 = vmatprep.subr.mxu0 %v166
    %306 = vmatpush1.msra.mxu0 %v165
    %307 = vmatprep.subr.mxu0 %v170
    %308 = vmatpush1.msra.mxu0 %v169
    %309 = vmatprep.subr.mxu0 %v174
    %310 = vmatpush1.msra.mxu0 %v173
    %311 = vmatprep.subr.mxu0 %v178
    %312 = vmatpush1.msra.mxu0 %v177
    %313 = vmatprep.subr.mxu0 %v182
    %314 = vmatpush1.msra.mxu0 %v181
    %315 = vmatprep.subr.mxu0 %v186
    %316 = vmatpush1.msra.mxu0 %v185
    %317 = vmatprep.subr.mxu0 %v190
    %318 = vmatpush1.msra.mxu0 %v189
    %319 = vmatprep.subr.mxu0 %v194
    %320 = vmatpush1.msra.mxu0 %v193
    %321 = vmatprep.subr.mxu0 %v198
    %322 = vmatpush1.msra.mxu0 %v197
    %323 = vmatprep.subr.mxu0 %v202
    %324 = vmatpush1.msra.mxu0 %v201
    %325 = vmatprep.subr.mxu0 %v206
    %326 = vmatpush1.msra.mxu0 %v205
    %327 = vmatprep.subr.mxu0 %v210
    %328 = vmatpush1.msra.mxu0 %v209
    %329 = vmatprep.subr.mxu0 %v214
    %330 = vmatpush1.msra.mxu0 %v213
    %331 = vmatprep.subr.mxu0 %v218
    %332 = vmatpush1.msra.mxu0 %v217
    %333 = vmatprep.subr.mxu0 %v222
    %334 = vmatpush1.msra.mxu0 %v221
    %335 = vmatprep.subr.mxu0 %v226
    %336 = vmatpush1.msra.mxu0 %v225
    %337 = vmatprep.subr.mxu0 %v230
    %338 = vmatpush1.msra.mxu0 %v229
    %339 = vmatprep.subr.mxu0 %v234
    %340 = vmatpush1.msra.mxu0 %v233
    %341 = vmatprep.subr.mxu0 %v238
    %342 = vmatpush1.msra.mxu0 %v237
    %343 = vmatprep.subr.mxu0 %v242
    %344 = vmatpush1.msra.mxu0 %v241
    %345 = vmatprep.subr.mxu0 %v246
    %346 = vmatpush1.msra.mxu0 %v245
    %347 = vmatprep.subr.mxu0 %v250
    %348 = vmatpush1.msra.mxu0 %v249
    %349 = vmatprep.subr.mxu0 %v254
    %350 = vmatpush1.msra.mxu0 %v253
    %351 = vmatprep.subr.mxu0 %v258
    %352 = vmatpush1.msra.mxu0 %v257
    %353 = vmatprep.subr.mxu0 %v262
    %354 = vmatpush1.msra.mxu0 %v261
    %355 = vmatprep.subr.mxu0 %v266
    %356 = vmatpush1.msra.mxu0 %v265
    %357 = vmatprep.subr.mxu0 %v270
    %358 = vmatpush1.msra.mxu0 %v269
    %359 = vmatprep.mubr.f32.mxu0 %v144
    %360 = vmatmul.mubr.f32.gmra.mrb[0].mxu0 %v143
    %v361 = vpop.f32.mrb[0].mxu0
    %v362 = vadd.f32 %v278, %v361
    %v363 = vpop.f32.mrb[0].mxu0
    %v364 = vadd.f32 %v282, %v363
    %365 = vdwg.mxu0
    %366 = vmatprep.subr.mxu0 %v148
    %367 = vmatpush1.msra.mxu0 %v147
    %368 = vmatprep.subr.mxu0 %v152
    %369 = vmatpush1.msra.mxu0 %v151
    %370 = vmatprep.subr.mxu0 %v156
    %371 = vmatpush1.msra.mxu0 %v155
    %372 = vmatprep.subr.mxu0 %v160
    %373 = vmatpush1.msra.mxu0 %v159
    %374 = vmatprep.subr.mxu0 %v164
    %375 = vmatpush1.msra.mxu0 %v163
    %376 = vmatprep.subr.mxu0 %v168
    %377 = vmatpush1.msra.mxu0 %v167
    %378 = vmatprep.subr.mxu0 %v172
    %379 = vmatpush1.msra.mxu0 %v171
    %380 = vmatprep.subr.mxu0 %v176
    %381 = vmatpush1.msra.mxu0 %v175
    %382 = vmatprep.subr.mxu0 %v180
    %383 = vmatpush1.msra.mxu0 %v179
    %384 = vmatprep.subr.mxu0 %v184
    %385 = vmatpush1.msra.mxu0 %v183
    %386 = vmatprep.subr.mxu0 %v188
    %387 = vmatpush1.msra.mxu0 %v187
    %388 = vmatprep.subr.mxu0 %v192
    %389 = vmatpush1.msra.mxu0 %v191
    %390 = vmatprep.subr.mxu0 %v196
    %391 = vmatpush1.msra.mxu0 %v195
    %392 = vmatprep.subr.mxu0 %v200
    %393 = vmatpush1.msra.mxu0 %v199
    %394 = vmatprep.subr.mxu0 %v204
    %395 = vmatpush1.msra.mxu0 %v203
    %396 = vmatprep.subr.mxu0 %v208
    %397 = vmatpush1.msra.mxu0 %v207
    %398 = vmatprep.subr.mxu0 %v212
    %399 = vmatpush1.msra.mxu0 %v211
    %400 = vmatprep.subr.mxu0 %v216
    %401 = vmatpush1.msra.mxu0 %v215
    %402 = vmatprep.subr.mxu0 %v220
    %403 = vmatpush1.msra.mxu0 %v219
    %404 = vmatprep.subr.mxu0 %v224
    %405 = vmatpush1.msra.mxu0 %v223
    %406 = vmatprep.subr.mxu0 %v228
    %407 = vmatpush1.msra.mxu0 %v227
    %408 = vmatprep.subr.mxu0 %v232
    %409 = vmatpush1.msra.mxu0 %v231
    %410 = vmatprep.subr.mxu0 %v236
    %411 = vmatpush1.msra.mxu0 %v235
    %412 = vmatprep.subr.mxu0 %v240
    %413 = vmatpush1.msra.mxu0 %v239
    %414 = vmatprep.subr.mxu0 %v244
    %415 = vmatpush1.msra.mxu0 %v243
    %416 = vmatprep.subr.mxu0 %v248
    %417 = vmatpush1.msra.mxu0 %v247
    %418 = vmatprep.subr.mxu0 %v252
    %419 = vmatpush1.msra.mxu0 %v251
    %420 = vmatprep.subr.mxu0 %v256
    %421 = vmatpush1.msra.mxu0 %v255
    %422 = vmatprep.subr.mxu0 %v260
    %423 = vmatpush1.msra.mxu0 %v259
    %424 = vmatprep.subr.mxu0 %v264
    %425 = vmatpush1.msra.mxu0 %v263
    %426 = vmatprep.subr.mxu0 %v268
    %427 = vmatpush1.msra.mxu0 %v267
    %428 = vmatprep.subr.mxu0 %v272
    %429 = vmatpush1.msra.mxu0 %v271
    %430 = vmatprep.mubr.f32.mxu0 %v144
    %431 = vmatmul.mubr.f32.gmra.mrb[0].mxu0 %v143
    %v432 = vpop.f32.mrb[0].mxu0
    %v433 = vadd.f32 %v286, %v432
    %v434 = vpop.f32.mrb[0].mxu0
    %v435 = vadd.f32 %v290, %v434
    %436 = vdwg.mxu0
    %v437 = vmax.f32 %v362, 0.0
    %v438 = vmax.f32 %v364, 0.0
    %v439 = vmax.f32 %v433, 0.0
    %v440 = vmax.f32 %v435, 0.0
    %v441 = vld [vmem:[%s5] sm:$0xff]
    %v442 = vld [vmem:[%s5 + $0x8] sm:$0xff]
    %v443 = vld [vmem:[%s5 + $0x10] sm:$0xff]
    %v444 = vld [vmem:[%s5 + $0x18] sm:$0xff]
    %v445 = vld [vmem:[%s5 + $0x20] sm:$0xff]
    %v446 = vld [vmem:[%s5 + $0x28] sm:$0xff]
    %v447 = vld [vmem:[%s5 + $0x30] sm:$0xff]
    %v448 = vld [vmem:[%s5 + $0x38] sm:$0xff]
    %v449 = vld [vmem:[%s5 + $0x40] sm:$0xff]
    %v450 = vld [vmem:[%s5 + $0x48] sm:$0xff]
    %v451 = vld [vmem:[%s5 + $0x50] sm:$0xff]
    %v452 = vld [vmem:[%s5 + $0x58] sm:$0xff]
    %v453 = vld [vmem:[%s5 + $0x60] sm:$0xff]
    %v454 = vld [vmem:[%s5 + $0x68] sm:$0xff]
    %v455 = vld [vmem:[%s5 + $0x70] sm:$0xff]
    %v456 = vld [vmem:[%s5 + $0x78] sm:$0xff]
    %v457 = vld [vmem:[%s5 + $0x80] sm:$0xff]
    %v458 = vld [vmem:[%s5 + $0x88] sm:$0xff]
    %v459 = vld [vmem:[%s5 + $0x90] sm:$0xff]
    %v460 = vld [vmem:[%s5 + $0x98] sm:$0xff]
    %v461 = vld [vmem:[%s5 + $0xa0] sm:$0xff]
    %v462 = vld [vmem:[%s5 + $0xa8] sm:$0xff]
    %v463 = vld [vmem:[%s5 + $0xb0] sm:$0xff]
    %v464 = vld [vmem:[%s5 + $0xb8] sm:$0xff]
    %v465 = vld [vmem:[%s5 + $0xc0] sm:$0xff]
    %v466 = vld [vmem:[%s5 + $0xc8] sm:$0xff]
    %v467 = vld [vmem:[%s5 + $0xd0] sm:$0xff]
    %v468 = vld [vmem:[%s5 + $0xd8] sm:$0xff]
    %v469 = vld [vmem:[%s5 + $0xe0] sm:$0xff]
    %v470 = vld [vmem:[%s5 + $0xe8] sm:$0xff]
    %v471 = vld [vmem:[%s5 + $0xf0] sm:$0xff]
    %v472 = vld [vmem:[%s5 + $0xf8] sm:$0xff]
    %v473 = vld [vmem:[%s5 + $0x100] sm:$0xff]
    %v474 = vld [vmem:[%s5 + $0x108] sm:$0xff]
    %v475 = vld [vmem:[%s5 + $0x110] sm:$0xff]
    %v476 = vld [vmem:[%s5 + $0x118] sm:$0xff]
    %v477 = vld [vmem:[%s5 + $0x120] sm:$0xff]
    %v478 = vld [vmem:[%s5 + $0x128] sm:$0xff]
    %v479 = vld [vmem:[%s5 + $0x130] sm:$0xff]
    %v480 = vld [vmem:[%s5 + $0x138] sm:$0xff]
    %v481 = vld [vmem:[%s5 + $0x140] sm:$0xff]
    %v482 = vld [vmem:[%s5 + $0x148] sm:$0xff]
    %v483 = vld [vmem:[%s5 + $0x150] sm:$0xff]
    %v484 = vld [vmem:[%s5 + $0x158] sm:$0xff]
    %v485 = vld [vmem:[%s5 + $0x160] sm:$0xff]
    %v486 = vld [vmem:[%s5 + $0x168] sm:$0xff]
    %v487 = vld [vmem:[%s5 + $0x170] sm:$0xff]
    %v488 = vld [vmem:[%s5 + $0x178] sm:$0xff]
    %v489 = vld [vmem:[%s5 + $0x180] sm:$0xff]
    %v490 = vld [vmem:[%s5 + $0x188] sm:$0xff]
    %v491 = vld [vmem:[%s5 + $0x190] sm:$0xff]
    %v492 = vld [vmem:[%s5 + $0x198] sm:$0xff]
    %v493 = vld [vmem:[%s5 + $0x1a0] sm:$0xff]
    %v494 = vld [vmem:[%s5 + $0x1a8] sm:$0xff]
    %v495 = vld [vmem:[%s5 + $0x1b0] sm:$0xff]
    %v496 = vld [vmem:[%s5 + $0x1b8] sm:$0xff]
    %v497 = vld [vmem:[%s5 + $0x1c0] sm:$0xff]
    %v498 = vld [vmem:[%s5 + $0x1c8] sm:$0xff]
    %v499 = vld [vmem:[%s5 + $0x1d0] sm:$0xff]
    %v500 = vld [vmem:[%s5 + $0x1d8] sm:$0xff]
    %v501 = vld [vmem:[%s5 + $0x1e0] sm:$0xff]
    %v502 = vld [vmem:[%s5 + $0x1e8] sm:$0xff]
    %v503 = vld [vmem:[%s5 + $0x1f0] sm:$0xff]
    %v504 = vld [vmem:[%s5 + $0x1f8] sm:$0xff]
    %v505 = vld [vmem:[%s5 + $0x200] sm:$0xff]
    %v506 = vld [vmem:[%s5 + $0x208] sm:$0xff]
    %v507 = vld [vmem:[%s5 + $0x210] sm:$0xff]
    %v508 = vld [vmem:[%s5 + $0x218] sm:$0xff]
    %v509 = vld [vmem:[%s5 + $0x220] sm:$0xff]
    %v510 = vld [vmem:[%s5 + $0x228] sm:$0xff]
    %v511 = vld [vmem:[%s5 + $0x230] sm:$0xff]
    %v512 = vld [vmem:[%s5 + $0x238] sm:$0xff]
    %v513 = vld [vmem:[%s5 + $0x240] sm:$0xff]
    %v514 = vld [vmem:[%s5 + $0x248] sm:$0xff]
    %v515 = vld [vmem:[%s5 + $0x250] sm:$0xff]
    %v516 = vld [vmem:[%s5 + $0x258] sm:$0xff]
    %v517 = vld [vmem:[%s5 + $0x260] sm:$0xff]
    %v518 = vld [vmem:[%s5 + $0x268] sm:$0xff]
    %v519 = vld [vmem:[%s5 + $0x270] sm:$0xff]
    %v520 = vld [vmem:[%s5 + $0x278] sm:$0xff]
    %v521 = vld [vmem:[%s5 + $0x280] sm:$0xff]
    %v522 = vld [vmem:[%s5 + $0x288] sm:$0xff]
    %v523 = vld [vmem:[%s5 + $0x290] sm:$0xff]
    %v524 = vld [vmem:[%s5 + $0x298] sm:$0xff]
    %v525 = vld [vmem:[%s5 + $0x2a0] sm:$0xff]
    %v526 = vld [vmem:[%s5 + $0x2a8] sm:$0xff]
    %v527 = vld [vmem:[%s5 + $0x2b0] sm:$0xff]
    %v528 = vld [vmem:[%s5 + $0x2b8] sm:$0xff]
    %v529 = vld [vmem:[%s5 + $0x2c0] sm:$0xff]
    %v530 = vld [vmem:[%s5 + $0x2c8] sm:$0xff]
    %v531 = vld [vmem:[%s5 + $0x2d0] sm:$0xff]
    %v532 = vld [vmem:[%s5 + $0x2d8] sm:$0xff]
    %v533 = vld [vmem:[%s5 + $0x2e0] sm:$0xff]
    %v534 = vld [vmem:[%s5 + $0x2e8] sm:$0xff]
    %v535 = vld [vmem:[%s5 + $0x2f0] sm:$0xff]
    %v536 = vld [vmem:[%s5 + $0x2f8] sm:$0xff]
    %v537 = vld [vmem:[%s5 + $0x300] sm:$0xff]
    %v538 = vld [vmem:[%s5 + $0x308] sm:$0xff]
    %v539 = vld [vmem:[%s5 + $0x310] sm:$0xff]
    %v540 = vld [vmem:[%s5 + $0x318] sm:$0xff]
    %v541 = vld [vmem:[%s5 + $0x320] sm:$0xff]
    %v542 = vld [vmem:[%s5 + $0x328] sm:$0xff]
    %v543 = vld [vmem:[%s5 + $0x330] sm:$0xff]
    %v544 = vld [vmem:[%s5 + $0x338] sm:$0xff]
    %v545 = vld [vmem:[%s5 + $0x340] sm:$0xff]
    %v546 = vld [vmem:[%s5 + $0x348] sm:$0xff]
    %v547 = vld [vmem:[%s5 + $0x350] sm:$0xff]
    %v548 = vld [vmem:[%s5 + $0x358] sm:$0xff]
    %v549 = vld [vmem:[%s5 + $0x360] sm:$0xff]
    %v550 = vld [vmem:[%s5 + $0x368] sm:$0xff]
    %v551 = vld [vmem:[%s5 + $0x370] sm:$0xff]
    %v552 = vld [vmem:[%s5 + $0x378] sm:$0xff]
    %v553 = vld [vmem:[%s5 + $0x380] sm:$0xff]
    %v554 = vld [vmem:[%s5 + $0x388] sm:$0xff]
    %v555 = vld [vmem:[%s5 + $0x390] sm:$0xff]
    %v556 = vld [vmem:[%s5 + $0x398] sm:$0xff]
    %v557 = vld [vmem:[%s5 + $0x3a0] sm:$0xff]
    %v558 = vld [vmem:[%s5 + $0x3a8] sm:$0xff]
    %v559 = vld [vmem:[%s5 + $0x3b0] sm:$0xff]
    %v560 = vld [vmem:[%s5 + $0x3b8] sm:$0xff]
    %v561 = vld [vmem:[%s5 + $0x3c0] sm:$0xff]
    %v562 = vld [vmem:[%s5 + $0x3c8] sm:$0xff]
    %v563 = vld [vmem:[%s5 + $0x3d0] sm:$0xff]
    %v564 = vld [vmem:[%s5 + $0x3d8] sm:$0xff]
    %v565 = vld [vmem:[%s5 + $0x3e0] sm:$0xff]
    %v566 = vld [vmem:[%s5 + $0x3e8] sm:$0xff]
    %v567 = vld [vmem:[%s5 + $0x3f0] sm:$0xff]
    %v568 = vld [vmem:[%s5 + $0x3f8] sm:$0xff]
    %v569 = vld [vmem:[%s5 + $0x400] sm:$0xff]
    %v570 = vld [vmem:[%s5 + $0x408] sm:$0xff]
    %v571 = vld [vmem:[%s5 + $0x410] sm:$0xff]
    %v572 = vld [vmem:[%s5 + $0x418] sm:$0xff]
    %v573 = vld [vmem:[%s5 + $0x420] sm:$0xff]
    %v574 = vld [vmem:[%s5 + $0x428] sm:$0xff]
    %v575 = vld [vmem:[%s5 + $0x430] sm:$0xff]
    %v576 = vld [vmem:[%s5 + $0x438] sm:$0xff]
    %v577 = vld [vmem:[%s5 + $0x440] sm:$0xff]
    %v578 = vld [vmem:[%s5 + $0x448] sm:$0xff]
    %v579 = vld [vmem:[%s5 + $0x450] sm:$0xff]
    %v580 = vld [vmem:[%s5 + $0x458] sm:$0xff]
    %v581 = vld [vmem:[%s5 + $0x460] sm:$0xff]
    %v582 = vld [vmem:[%s5 + $0x468] sm:$0xff]
    %v583 = vld [vmem:[%s5 + $0x470] sm:$0xff]
    %v584 = vld [vmem:[%s5 + $0x478] sm:$0xff]
    %v585 = vld [vmem:[%s5 + $0x480] sm:$0xff]
    %v586 = vld [vmem:[%s5 + $0x488] sm:$0xff]
    %v587 = vld [vmem:[%s5 + $0x490] sm:$0xff]
    %v588 = vld [vmem:[%s5 + $0x498] sm:$0xff]
    %v589 = vld [vmem:[%s5 + $0x4a0] sm:$0xff]
    %v590 = vld [vmem:[%s5 + $0x4a8] sm:$0xff]
    %v591 = vld [vmem:[%s5 + $0x4b0] sm:$0xff]
    %v592 = vld [vmem:[%s5 + $0x4b8] sm:$0xff]
    %v593 = vld [vmem:[%s5 + $0x4c0] sm:$0xff]
    %v594 = vld [vmem:[%s5 + $0x4c8] sm:$0xff]
    %v595 = vld [vmem:[%s5 + $0x4d0] sm:$0xff]
    %v596 = vld [vmem:[%s5 + $0x4d8] sm:$0xff]
    %v597 = vld [vmem:[%s5 + $0x4e0] sm:$0xff]
    %v598 = vld [vmem:[%s5 + $0x4e8] sm:$0xff]
    %v599 = vld [vmem:[%s5 + $0x4f0] sm:$0xff]
    %v600 = vld [vmem:[%s5 + $0x4f8] sm:$0xff]
    %v601 = vld [vmem:[%s5 + $0x500] sm:$0xff]
    %v602 = vld [vmem:[%s5 + $0x508] sm:$0xff]
    %v603 = vld [vmem:[%s5 + $0x510] sm:$0xff]
    %v604 = vld [vmem:[%s5 + $0x518] sm:$0xff]
    %v605 = vld [vmem:[%s5 + $0x520] sm:$0xff]
    %v606 = vld [vmem:[%s5 + $0x528] sm:$0xff]
    %v607 = vld [vmem:[%s5 + $0x530] sm:$0xff]
    %v608 = vld [vmem:[%s5 + $0x538] sm:$0xff]
    %v609 = vld [vmem:[%s5 + $0x540] sm:$0xff]
    %v610 = vld [vmem:[%s5 + $0x548] sm:$0xff]
    %v611 = vld [vmem:[%s5 + $0x550] sm:$0xff]
    %v612 = vld [vmem:[%s5 + $0x558] sm:$0xff]
    %v613 = vld [vmem:[%s5 + $0x560] sm:$0xff]
    %v614 = vld [vmem:[%s5 + $0x568] sm:$0xff]
    %v615 = vld [vmem:[%s5 + $0x570] sm:$0xff]
    %v616 = vld [vmem:[%s5 + $0x578] sm:$0xff]
    %v617 = vld [vmem:[%s5 + $0x580] sm:$0xff]
    %v618 = vld [vmem:[%s5 + $0x588] sm:$0xff]
    %v619 = vld [vmem:[%s5 + $0x590] sm:$0xff]
    %v620 = vld [vmem:[%s5 + $0x598] sm:$0xff]
    %v621 = vld [vmem:[%s5 + $0x5a0] sm:$0xff]
    %v622 = vld [vmem:[%s5 + $0x5a8] sm:$0xff]
    %v623 = vld [vmem:[%s5 + $0x5b0] sm:$0xff]
    %v624 = vld [vmem:[%s5 + $0x5b8] sm:$0xff]
    %v625 = vld [vmem:[%s5 + $0x5c0] sm:$0xff]
    %v626 = vld [vmem:[%s5 + $0x5c8] sm:$0xff]
    %v627 = vld [vmem:[%s5 + $0x5d0] sm:$0xff]
    %v628 = vld [vmem:[%s5 + $0x5d8] sm:$0xff]
    %v629 = vld [vmem:[%s5 + $0x5e0] sm:$0xff]
    %v630 = vld [vmem:[%s5 + $0x5e8] sm:$0xff]
    %v631 = vld [vmem:[%s5 + $0x5f0] sm:$0xff]
    %v632 = vld [vmem:[%s5 + $0x5f8] sm:$0xff]
    %v633 = vld [vmem:[%s5 + $0x600] sm:$0xff]
    %v634 = vld [vmem:[%s5 + $0x608] sm:$0xff]
    %v635 = vld [vmem:[%s5 + $0x610] sm:$0xff]
    %v636 = vld [vmem:[%s5 + $0x618] sm:$0xff]
    %v637 = vld [vmem:[%s5 + $0x620] sm:$0xff]
    %v638 = vld [vmem:[%s5 + $0x628] sm:$0xff]
    %v639 = vld [vmem:[%s5 + $0x630] sm:$0xff]
    %v640 = vld [vmem:[%s5 + $0x638] sm:$0xff]
    %v641 = vld [vmem:[%s5 + $0x640] sm:$0xff]
    %v642 = vld [vmem:[%s5 + $0x648] sm:$0xff]
    %v643 = vld [vmem:[%s5 + $0x650] sm:$0xff]
    %v644 = vld [vmem:[%s5 + $0x658] sm:$0xff]
    %v645 = vld [vmem:[%s5 + $0x660] sm:$0xff]
    %v646 = vld [vmem:[%s5 + $0x668] sm:$0xff]
    %v647 = vld [vmem:[%s5 + $0x670] sm:$0xff]
    %v648 = vld [vmem:[%s5 + $0x678] sm:$0xff]
    %v649 = vld [vmem:[%s5 + $0x680] sm:$0xff]
    %v650 = vld [vmem:[%s5 + $0x688] sm:$0xff]
    %v651 = vld [vmem:[%s5 + $0x690] sm:$0xff]
    %v652 = vld [vmem:[%s5 + $0x698] sm:$0xff]
    %v653 = vld [vmem:[%s5 + $0x6a0] sm:$0xff]
    %v654 = vld [vmem:[%s5 + $0x6a8] sm:$0xff]
    %v655 = vld [vmem:[%s5 + $0x6b0] sm:$0xff]
    %v656 = vld [vmem:[%s5 + $0x6b8] sm:$0xff]
    %v657 = vld [vmem:[%s5 + $0x6c0] sm:$0xff]
    %v658 = vld [vmem:[%s5 + $0x6c8] sm:$0xff]
    %v659 = vld [vmem:[%s5 + $0x6d0] sm:$0xff]
    %v660 = vld [vmem:[%s5 + $0x6d8] sm:$0xff]
    %v661 = vld [vmem:[%s5 + $0x6e0] sm:$0xff]
    %v662 = vld [vmem:[%s5 + $0x6e8] sm:$0xff]
    %v663 = vld [vmem:[%s5 + $0x6f0] sm:$0xff]
    %v664 = vld [vmem:[%s5 + $0x6f8] sm:$0xff]
    %v665 = vld [vmem:[%s5 + $0x700] sm:$0xff]
    %v666 = vld [vmem:[%s5 + $0x708] sm:$0xff]
    %v667 = vld [vmem:[%s5 + $0x710] sm:$0xff]
    %v668 = vld [vmem:[%s5 + $0x718] sm:$0xff]
    %v669 = vld [vmem:[%s5 + $0x720] sm:$0xff]
    %v670 = vld [vmem:[%s5 + $0x728] sm:$0xff]
    %v671 = vld [vmem:[%s5 + $0x730] sm:$0xff]
    %v672 = vld [vmem:[%s5 + $0x738] sm:$0xff]
    %v673 = vld [vmem:[%s5 + $0x740] sm:$0xff]
    %v674 = vld [vmem:[%s5 + $0x748] sm:$0xff]
    %v675 = vld [vmem:[%s5 + $0x750] sm:$0xff]
    %v676 = vld [vmem:[%s5 + $0x758] sm:$0xff]
    %v677 = vld [vmem:[%s5 + $0x760] sm:$0xff]
    %v678 = vld [vmem:[%s5 + $0x768] sm:$0xff]
    %v679 = vld [vmem:[%s5 + $0x770] sm:$0xff]
    %v680 = vld [vmem:[%s5 + $0x778] sm:$0xff]
    %v681 = vld [vmem:[%s5 + $0x780] sm:$0xff]
    %v682 = vld [vmem:[%s5 + $0x788] sm:$0xff]
    %v683 = vld [vmem:[%s5 + $0x790] sm:$0xff]
    %v684 = vld [vmem:[%s5 + $0x798] sm:$0xff]
    %v685 = vld [vmem:[%s5 + $0x7a0] sm:$0xff]
    %v686 = vld [vmem:[%s5 + $0x7a8] sm:$0xff]
    %v687 = vld [vmem:[%s5 + $0x7b0] sm:$0xff]
    %v688 = vld [vmem:[%s5 + $0x7b8] sm:$0xff]
    %v689 = vld [vmem:[%s5 + $0x7c0] sm:$0xff]
    %v690 = vld [vmem:[%s5 + $0x7c8] sm:$0xff]
    %v691 = vld [vmem:[%s5 + $0x7d0] sm:$0xff]
    %v692 = vld [vmem:[%s5 + $0x7d8] sm:$0xff]
    %v693 = vld [vmem:[%s5 + $0x7e0] sm:$0xff]
    %v694 = vld [vmem:[%s5 + $0x7e8] sm:$0xff]
    %v695 = vld [vmem:[%s5 + $0x7f0] sm:$0xff]
    %v696 = vld [vmem:[%s5 + $0x7f8] sm:$0xff]
    %v697 = vld [vmem:[%s5 + $0x800] sm:$0xff]
    %v698 = vld [vmem:[%s5 + $0x808] sm:$0xff]
    %v699 = vld [vmem:[%s5 + $0x810] sm:$0xff]
    %v700 = vld [vmem:[%s5 + $0x818] sm:$0xff]
    %v701 = vld [vmem:[%s5 + $0x820] sm:$0xff]
    %v702 = vld [vmem:[%s5 + $0x828] sm:$0xff]
    %v703 = vld [vmem:[%s5 + $0x830] sm:$0xff]
    %v704 = vld [vmem:[%s5 + $0x838] sm:$0xff]
    %v705 = vld [vmem:[%s5 + $0x840] sm:$0xff]
    %v706 = vld [vmem:[%s5 + $0x848] sm:$0xff]
    %v707 = vld [vmem:[%s5 + $0x850] sm:$0xff]
    %v708 = vld [vmem:[%s5 + $0x858] sm:$0xff]
    %v709 = vld [vmem:[%s5 + $0x860] sm:$0xff]
    %v710 = vld [vmem:[%s5 + $0x868] sm:$0xff]
    %v711 = vld [vmem:[%s5 + $0x870] sm:$0xff]
    %v712 = vld [vmem:[%s5 + $0x878] sm:$0xff]
    %v713 = vld [vmem:[%s5 + $0x880] sm:$0xff]
    %v714 = vld [vmem:[%s5 + $0x888] sm:$0xff]
    %v715 = vld [vmem:[%s5 + $0x890] sm:$0xff]
    %v716 = vld [vmem:[%s5 + $0x898] sm:$0xff]
    %v717 = vld [vmem:[%s5 + $0x8a0] sm:$0xff]
    %v718 = vld [vmem:[%s5 + $0x8a8] sm:$0xff]
    %v719 = vld [vmem:[%s5 + $0x8b0] sm:$0xff]
    %v720 = vld [vmem:[%s5 + $0x8b8] sm:$0xff]
    %v721 = vld [vmem:[%s5 + $0x8c0] sm:$0xff]
    %v722 = vld [vmem:[%s5 + $0x8c8] sm:$0xff]
    %v723 = vld [vmem:[%s5 + $0x8d0] sm:$0xff]
    %v724 = vld [vmem:[%s5 + $0x8d8] sm:$0xff]
    %v725 = vld [vmem:[%s5 + $0x8e0] sm:$0xff]
    %v726 = vld [vmem:[%s5 + $0x8e8] sm:$0xff]
    %v727 = vld [vmem:[%s5 + $0x8f0] sm:$0xff]
    %v728 = vld [vmem:[%s5 + $0x8f8] sm:$0xff]
    %v729 = vld [vmem:[%s5 + $0x900] sm:$0xff]
    %v730 = vld [vmem:[%s5 + $0x908] sm:$0xff]
    %v731 = vld [vmem:[%s5 + $0x910] sm:$0xff]
    %v732 = vld [vmem:[%s5 + $0x918] sm:$0xff]
    %v733 = vld [vmem:[%s5 + $0x920] sm:$0xff]
    %v734 = vld [vmem:[%s5 + $0x928] sm:$0xff]
    %v735 = vld [vmem:[%s5 + $0x930] sm:$0xff]
    %v736 = vld [vmem:[%s5 + $0x938] sm:$0xff]
    %v737 = vld [vmem:[%s5 + $0x940] sm:$0xff]
    %v738 = vld [vmem:[%s5 + $0x948] sm:$0xff]
    %v739 = vld [vmem:[%s5 + $0x950] sm:$0xff]
    %v740 = vld [vmem:[%s5 + $0x958] sm:$0xff]
    %v741 = vld [vmem:[%s5 + $0x960] sm:$0xff]
    %v742 = vld [vmem:[%s5 + $0x968] sm:$0xff]
    %v743 = vld [vmem:[%s5 + $0x970] sm:$0xff]
    %v744 = vld [vmem:[%s5 + $0x978] sm:$0xff]
    %v745 = vld [vmem:[%s5 + $0x980] sm:$0xff]
    %v746 = vld [vmem:[%s5 + $0x988] sm:$0xff]
    %v747 = vld [vmem:[%s5 + $0x990] sm:$0xff]
    %v748 = vld [vmem:[%s5 + $0x998] sm:$0xff]
    %v749 = vld [vmem:[%s5 + $0x9a0] sm:$0xff]
    %v750 = vld [vmem:[%s5 + $0x9a8] sm:$0xff]
    %v751 = vld [vmem:[%s5 + $0x9b0] sm:$0xff]
    %v752 = vld [vmem:[%s5 + $0x9b8] sm:$0xff]
    %v753 = vld [vmem:[%s5 + $0x9c0] sm:$0xff]
    %v754 = vld [vmem:[%s5 + $0x9c8] sm:$0xff]
    %v755 = vld [vmem:[%s5 + $0x9d0] sm:$0xff]
    %v756 = vld [vmem:[%s5 + $0x9d8] sm:$0xff]
    %v757 = vld [vmem:[%s5 + $0x9e0] sm:$0xff]
    %v758 = vld [vmem:[%s5 + $0x9e8] sm:$0xff]
    %v759 = vld [vmem:[%s5 + $0x9f0] sm:$0xff]
    %v760 = vld [vmem:[%s5 + $0x9f8] sm:$0xff]
    %v761 = vld [vmem:[%s5 + $0xa00] sm:$0xff]
    %v762 = vld [vmem:[%s5 + $0xa08] sm:$0xff]
    %v763 = vld [vmem:[%s5 + $0xa10] sm:$0xff]
    %v764 = vld [vmem:[%s5 + $0xa18] sm:$0xff]
    %v765 = vld [vmem:[%s5 + $0xa20] sm:$0xff]
    %v766 = vld [vmem:[%s5 + $0xa28] sm:$0xff]
    %v767 = vld [vmem:[%s5 + $0xa30] sm:$0xff]
    %v768 = vld [vmem:[%s5 + $0xa38] sm:$0xff]
    %v769 = vld [vmem:[%s5 + $0xa40] sm:$0xff]
    %v770 = vld [vmem:[%s5 + $0xa48] sm:$0xff]
    %v771 = vld [vmem:[%s5 + $0xa50] sm:$0xff]
    %v772 = vld [vmem:[%s5 + $0xa58] sm:$0xff]
    %v773 = vld [vmem:[%s5 + $0xa60] sm:$0xff]
    %v774 = vld [vmem:[%s5 + $0xa68] sm:$0xff]
    %v775 = vld [vmem:[%s5 + $0xa70] sm:$0xff]
    %v776 = vld [vmem:[%s5 + $0xa78] sm:$0xff]
    %v777 = vld [vmem:[%s5 + $0xa80] sm:$0xff]
    %v778 = vld [vmem:[%s5 + $0xa88] sm:$0xff]
    %v779 = vld [vmem:[%s5 + $0xa90] sm:$0xff]
    %v780 = vld [vmem:[%s5 + $0xa98] sm:$0xff]
    %v781 = vld [vmem:[%s5 + $0xaa0] sm:$0xff]
    %v782 = vld [vmem:[%s5 + $0xaa8] sm:$0xff]
    %v783 = vld [vmem:[%s5 + $0xab0] sm:$0xff]
    %v784 = vld [vmem:[%s5 + $0xab8] sm:$0xff]
    %v785 = vld [vmem:[%s5 + $0xac0] sm:$0xff]
    %v786 = vld [vmem:[%s5 + $0xac8] sm:$0xff]
    %v787 = vld [vmem:[%s5 + $0xad0] sm:$0xff]
    %v788 = vld [vmem:[%s5 + $0xad8] sm:$0xff]
    %v789 = vld [vmem:[%s5 + $0xae0] sm:$0xff]
    %v790 = vld [vmem:[%s5 + $0xae8] sm:$0xff]
    %v791 = vld [vmem:[%s5 + $0xaf0] sm:$0xff]
    %v792 = vld [vmem:[%s5 + $0xaf8] sm:$0xff]
    %v793 = vld [vmem:[%s5 + $0xb00] sm:$0xff]
    %v794 = vld [vmem:[%s5 + $0xb08] sm:$0xff]
    %v795 = vld [vmem:[%s5 + $0xb10] sm:$0xff]
    %v796 = vld [vmem:[%s5 + $0xb18] sm:$0xff]
    %v797 = vld [vmem:[%s5 + $0xb20] sm:$0xff]
    %v798 = vld [vmem:[%s5 + $0xb28] sm:$0xff]
    %v799 = vld [vmem:[%s5 + $0xb30] sm:$0xff]
    %v800 = vld [vmem:[%s5 + $0xb38] sm:$0xff]
    %v801 = vld [vmem:[%s5 + $0xb40] sm:$0xff]
    %v802 = vld [vmem:[%s5 + $0xb48] sm:$0xff]
    %v803 = vld [vmem:[%s5 + $0xb50] sm:$0xff]
    %v804 = vld [vmem:[%s5 + $0xb58] sm:$0xff]
    %v805 = vld [vmem:[%s5 + $0xb60] sm:$0xff]
    %v806 = vld [vmem:[%s5 + $0xb68] sm:$0xff]
    %v807 = vld [vmem:[%s5 + $0xb70] sm:$0xff]
    %v808 = vld [vmem:[%s5 + $0xb78] sm:$0xff]
    %v809 = vld [vmem:[%s5 + $0xb80] sm:$0xff]
    %v810 = vld [vmem:[%s5 + $0xb88] sm:$0xff]
    %v811 = vld [vmem:[%s5 + $0xb90] sm:$0xff]
    %v812 = vld [vmem:[%s5 + $0xb98] sm:$0xff]
    %v813 = vld [vmem:[%s5 + $0xba0] sm:$0xff]
    %v814 = vld [vmem:[%s5 + $0xba8] sm:$0xff]
    %v815 = vld [vmem:[%s5 + $0xbb0] sm:$0xff]
    %v816 = vld [vmem:[%s5 + $0xbb8] sm:$0xff]
    %v817 = vld [vmem:[%s5 + $0xbc0] sm:$0xff]
    %v818 = vld [vmem:[%s5 + $0xbc8] sm:$0xff]
    %v819 = vld [vmem:[%s5 + $0xbd0] sm:$0xff]
    %v820 = vld [vmem:[%s5 + $0xbd8] sm:$0xff]
    %v821 = vld [vmem:[%s5 + $0xbe0] sm:$0xff]
    %v822 = vld [vmem:[%s5 + $0xbe8] sm:$0xff]
    %v823 = vld [vmem:[%s5 + $0xbf0] sm:$0xff]
    %v824 = vld [vmem:[%s5 + $0xbf8] sm:$0xff]
    %v825 = vld [vmem:[%s5 + $0xc00] sm:$0xff]
    %v826 = vld [vmem:[%s5 + $0xc08] sm:$0xff]
    %v827 = vld [vmem:[%s5 + $0xc10] sm:$0xff]
    %v828 = vld [vmem:[%s5 + $0xc18] sm:$0xff]
    %v829 = vld [vmem:[%s5 + $0xc20] sm:$0xff]
    %v830 = vld [vmem:[%s5 + $0xc28] sm:$0xff]
    %v831 = vld [vmem:[%s5 + $0xc30] sm:$0xff]
    %v832 = vld [vmem:[%s5 + $0xc38] sm:$0xff]
    %v833 = vld [vmem:[%s5 + $0xc40] sm:$0xff]
    %v834 = vld [vmem:[%s5 + $0xc48] sm:$0xff]
    %v835 = vld [vmem:[%s5 + $0xc50] sm:$0xff]
    %v836 = vld [vmem:[%s5 + $0xc58] sm:$0xff]
    %v837 = vld [vmem:[%s5 + $0xc60] sm:$0xff]
    %v838 = vld [vmem:[%s5 + $0xc68] sm:$0xff]
    %v839 = vld [vmem:[%s5 + $0xc70] sm:$0xff]
    %v840 = vld [vmem:[%s5 + $0xc78] sm:$0xff]
    %v841 = vld [vmem:[%s5 + $0xc80] sm:$0xff]
    %v842 = vld [vmem:[%s5 + $0xc88] sm:$0xff]
    %v843 = vld [vmem:[%s5 + $0xc90] sm:$0xff]
    %v844 = vld [vmem:[%s5 + $0xc98] sm:$0xff]
    %v845 = vld [vmem:[%s5 + $0xca0] sm:$0xff]
    %v846 = vld [vmem:[%s5 + $0xca8] sm:$0xff]
    %v847 = vld [vmem:[%s5 + $0xcb0] sm:$0xff]
    %v848 = vld [vmem:[%s5 + $0xcb8] sm:$0xff]
    %v849 = vld [vmem:[%s5 + $0xcc0] sm:$0xff]
    %v850 = vld [vmem:[%s5 + $0xcc8] sm:$0xff]
    %v851 = vld [vmem:[%s5 + $0xcd0] sm:$0xff]
    %v852 = vld [vmem:[%s5 + $0xcd8] sm:$0xff]
    %v853 = vld [vmem:[%s5 + $0xce0] sm:$0xff]
    %v854 = vld [vmem:[%s5 + $0xce8] sm:$0xff]
    %v855 = vld [vmem:[%s5 + $0xcf0] sm:$0xff]
    %v856 = vld [vmem:[%s5 + $0xcf8] sm:$0xff]
    %v857 = vld [vmem:[%s5 + $0xd00] sm:$0xff]
    %v858 = vld [vmem:[%s5 + $0xd08] sm:$0xff]
    %v859 = vld [vmem:[%s5 + $0xd10] sm:$0xff]
    %v860 = vld [vmem:[%s5 + $0xd18] sm:$0xff]
    %v861 = vld [vmem:[%s5 + $0xd20] sm:$0xff]
    %v862 = vld [vmem:[%s5 + $0xd28] sm:$0xff]
    %v863 = vld [vmem:[%s5 + $0xd30] sm:$0xff]
    %v864 = vld [vmem:[%s5 + $0xd38] sm:$0xff]
    %v865 = vld [vmem:[%s5 + $0xd40] sm:$0xff]
    %v866 = vld [vmem:[%s5 + $0xd48] sm:$0xff]
    %v867 = vld [vmem:[%s5 + $0xd50] sm:$0xff]
    %v868 = vld [vmem:[%s5 + $0xd58] sm:$0xff]
    %v869 = vld [vmem:[%s5 + $0xd60] sm:$0xff]
    %v870 = vld [vmem:[%s5 + $0xd68] sm:$0xff]
    %v871 = vld [vmem:[%s5 + $0xd70] sm:$0xff]
    %v872 = vld [vmem:[%s5 + $0xd78] sm:$0xff]
    %v873 = vld [vmem:[%s5 + $0xd80] sm:$0xff]
    %v874 = vld [vmem:[%s5 + $0xd88] sm:$0xff]
    %v875 = vld [vmem:[%s5 + $0xd90] sm:$0xff]
    %v876 = vld [vmem:[%s5 + $0xd98] sm:$0xff]
    %v877 = vld [vmem:[%s5 + $0xda0] sm:$0xff]
    %v878 = vld [vmem:[%s5 + $0xda8] sm:$0xff]
    %v879 = vld [vmem:[%s5 + $0xdb0] sm:$0xff]
    %v880 = vld [vmem:[%s5 + $0xdb8] sm:$0xff]
    %v881 = vld [vmem:[%s5 + $0xdc0] sm:$0xff]
    %v882 = vld [vmem:[%s5 + $0xdc8] sm:$0xff]
    %v883 = vld [vmem:[%s5 + $0xdd0] sm:$0xff]
    %v884 = vld [vmem:[%s5 + $0xdd8] sm:$0xff]
    %v885 = vld [vmem:[%s5 + $0xde0] sm:$0xff]
    %v886 = vld [vmem:[%s5 + $0xde8] sm:$0xff]
    %v887 = vld [vmem:[%s5 + $0xdf0] sm:$0xff]
    %v888 = vld [vmem:[%s5 + $0xdf8] sm:$0xff]
    %v889 = vld [vmem:[%s6] sm:$0x7f]
    %v891 = vlaneseq
    %v892 = vshrl.u32 %v891, 7
    %v893 = vsub.s32 0, %v892
    %v894 = vrot.slane %v889, %v893
    %v895 = vlaneseq
    %v896 = vshrl.u32 %v895, 7
    %v897 = vsub.s32 1, %v896
    %v898 = vrot.slane %v889, %v897
    %v899 = vlaneseq
    %v900 = vshrl.u32 %v899, 7
    %v901 = vsub.s32 2, %v900
    %v902 = vrot.slane %v889, %v901
    %v903 = vlaneseq
    %v904 = vshrl.u32 %v903, 7
    %v905 = vsub.s32 3, %v904
    %v906 = vrot.slane %v889, %v905
    %v907 = vlaneseq
    %v908 = vshrl.u32 %v907, 7
    %v909 = vsub.s32 4, %v908
    %v910 = vrot.slane %v889, %v909
    %v911 = vlaneseq
    %v912 = vshrl.u32 %v911, 7
    %v913 = vsub.s32 5, %v912
    %v914 = vrot.slane %v889, %v913
    %v915 = vlaneseq
    %v916 = vshrl.u32 %v915, 7
    %v917 = vsub.s32 6, %v916
    %v918 = vrot.slane %v889, %v917
    %926 = vmatprep.subr.mxu0 %v442
    %927 = vmatpush1.msra.mxu0 %v441
    %928 = vmatprep.subr.mxu0 %v449
    %929 = vmatpush1.msra.mxu0 %v448
    %930 = vmatprep.subr.mxu0 %v456
    %931 = vmatpush1.msra.mxu0 %v455
    %932 = vmatprep.subr.mxu0 %v463
    %933 = vmatpush1.msra.mxu0 %v462
    %934 = vmatprep.subr.mxu0 %v470
    %935 = vmatpush1.msra.mxu0 %v469
    %936 = vmatprep.subr.mxu0 %v477
    %937 = vmatpush1.msra.mxu0 %v476
    %938 = vmatprep.subr.mxu0 %v484
    %939 = vmatpush1.msra.mxu0 %v483
    %940 = vmatprep.subr.mxu0 %v491
    %941 = vmatpush1.msra.mxu0 %v490
    %942 = vmatprep.subr.mxu0 %v498
    %943 = vmatpush1.msra.mxu0 %v497
    %944 = vmatprep.subr.mxu0 %v505
    %945 = vmatpush1.msra.mxu0 %v504
    %946 = vmatprep.subr.mxu0 %v512
    %947 = vmatpush1.msra.mxu0 %v511
    %948 = vmatprep.subr.mxu0 %v519
    %949 = vmatpush1.msra.mxu0 %v518
    %950 = vmatprep.subr.mxu0 %v526
    %951 = vmatpush1.msra.mxu0 %v525
    %952 = vmatprep.subr.mxu0 %v533
    %953 = vmatpush1.msra.mxu0 %v532
    %954 = vmatprep.subr.mxu0 %v540
    %955 = vmatpush1.msra.mxu0 %v539
    %956 = vmatprep.subr.mxu0 %v547
    %957 = vmatpush1.msra.mxu0 %v546
    %958 = vmatprep.subr.mxu0 %v554
    %959 = vmatpush1.msra.mxu0 %v553
    %960 = vmatprep.subr.mxu0 %v561
    %961 = vmatpush1.msra.mxu0 %v560
    %962 = vmatprep.subr.mxu0 %v568
    %963 = vmatpush1.msra.mxu0 %v567
    %964 = vmatprep.subr.mxu0 %v575
    %965 = vmatpush1.msra.mxu0 %v574
    %966 = vmatprep.subr.mxu0 %v582
    %967 = vmatpush1.msra.mxu0 %v581
    %968 = vmatprep.subr.mxu0 %v589
    %969 = vmatpush1.msra.mxu0 %v588
    %970 = vmatprep.subr.mxu0 %v596
    %971 = vmatpush1.msra.mxu0 %v595
    %972 = vmatprep.subr.mxu0 %v603
    %973 = vmatpush1.msra.mxu0 %v602
    %974 = vmatprep.subr.mxu0 %v610
    %975 = vmatpush1.msra.mxu0 %v609
    %976 = vmatprep.subr.mxu0 %v617
    %977 = vmatpush1.msra.mxu0 %v616
    %978 = vmatprep.subr.mxu0 %v624
    %979 = vmatpush1.msra.mxu0 %v623
    %980 = vmatprep.subr.mxu0 %v631
    %981 = vmatpush1.msra.mxu0 %v630
    %982 = vmatprep.subr.mxu0 %v638
    %983 = vmatpush1.msra.mxu0 %v637
    %984 = vmatprep.subr.mxu0 %v645
    %985 = vmatpush1.msra.mxu0 %v644
    %986 = vmatprep.subr.mxu0 %v652
    %987 = vmatpush1.msra.mxu0 %v651
    %988 = vmatprep.subr.mxu0 %v659
    %989 = vmatpush1.msra.mxu0 %v658
    %990 = vmatprep.mubr.f32.mxu0 %v438
    %991 = vmatmul.mubr.f32.gmra.mrb[0].mxu0 %v437
    %v992 = vpop.f32.mrb[0].mxu0
    %v993 = vadd.f32 %v894, %v992
    %v994 = vpop.f32.mrb[0].mxu0
    %v995 = vadd.f32 %v898, %v994
    %996 = vdwg.mxu0
    %997 = vmatprep.subr.mxu0 %v666
    %998 = vmatpush1.msra.mxu0 %v665
    %999 = vmatprep.subr.mxu0 %v673
    %1000 = vmatpush1.msra.mxu0 %v672
    %1001 = vmatprep.subr.mxu0 %v680
    %1002 = vmatpush1.msra.mxu0 %v679
    %1003 = vmatprep.subr.mxu0 %v687
    %1004 = vmatpush1.msra.mxu0 %v686
    %1005 = vmatprep.subr.mxu0 %v694
    %1006 = vmatpush1.msra.mxu0 %v693
    %1007 = vmatprep.subr.mxu0 %v701
    %1008 = vmatpush1.msra.mxu0 %v700
    %1009 = vmatprep.subr.mxu0 %v708
    %1010 = vmatpush1.msra.mxu0 %v707
    %1011 = vmatprep.subr.mxu0 %v715
    %1012 = vmatpush1.msra.mxu0 %v714
    %1013 = vmatprep.subr.mxu0 %v722
    %1014 = vmatpush1.msra.mxu0 %v721
    %1015 = vmatprep.subr.mxu0 %v729
    %1016 = vmatpush1.msra.mxu0 %v728
    %1017 = vmatprep.subr.mxu0 %v736
    %1018 = vmatpush1.msra.mxu0 %v735
    %1019 = vmatprep.subr.mxu0 %v743
    %1020 = vmatpush1.msra.mxu0 %v742
    %1021 = vmatprep.subr.mxu0 %v750
    %1022 = vmatpush1.msra.mxu0 %v749
    %1023 = vmatprep.subr.mxu0 %v757
    %1024 = vmatpush1.msra.mxu0 %v756
    %1025 = vmatprep.subr.mxu0 %v764
    %1026 = vmatpush1.msra.mxu0 %v763
    %1027 = vmatprep.subr.mxu0 %v771
    %1028 = vmatpush1.msra.mxu0 %v770
    %1029 = vmatprep.subr.mxu0 %v778
    %1030 = vmatpush1.msra.mxu0 %v777
    %1031 = vmatprep.subr.mxu0 %v785
    %1032 = vmatpush1.msra.mxu0 %v784
    %1033 = vmatprep.subr.mxu0 %v792
    %1034 = vmatpush1.msra.mxu0 %v791
    %1035 = vmatprep.subr.mxu0 %v799
    %1036 = vmatpush1.msra.mxu0 %v798
    %1037 = vmatprep.subr.mxu0 %v806
    %1038 = vmatpush1.msra.mxu0 %v805
    %1039 = vmatprep.subr.mxu0 %v813
    %1040 = vmatpush1.msra.mxu0 %v812
    %1041 = vmatprep.subr.mxu0 %v820
    %1042 = vmatpush1.msra.mxu0 %v819
    %1043 = vmatprep.subr.mxu0 %v827
    %1044 = vmatpush1.msra.mxu0 %v826
    %1045 = vmatprep.subr.mxu0 %v834
    %1046 = vmatpush1.msra.mxu0 %v833
    %1047 = vmatprep.subr.mxu0 %v841
    %1048 = vmatpush1.msra.mxu0 %v840
    %1049 = vmatprep.subr.mxu0 %v848
    %1050 = vmatpush1.msra.mxu0 %v847
    %1051 = vmatprep.subr.mxu0 %v855
    %1052 = vmatpush1.msra.mxu0 %v854
    %1053 = vmatprep.subr.mxu0 %v862
    %1054 = vmatpush1.msra.mxu0 %v861
    %1055 = vmatprep.subr.mxu0 %v869
    %1056 = vmatpush1.msra.mxu0 %v868
    %1057 = vmatprep.subr.mxu0 %v876
    %1058 = vmatpush1.msra.mxu0 %v875
    %1059 = vmatprep.subr.mxu0 %v883
    %1060 = vmatpush1.msra.mxu0 %v882
    %1061 = vmatprep.mubr.f32.mxu0 %v440
    %1062 = vmatmul.mubr.f32.gmra.mrb[0].mxu0 %v439
    %v1063 = vpop.f32.mrb[0].mxu0
    %v1064 = vadd.f32 %v993, %v1063
    %v1065 = vpop.f32.mrb[0].mxu0
    %v1066 = vadd.f32 %v995, %v1065
    %1067 = vdwg.mxu0
    %1068 = vmatprep.subr.mxu0 %v444
    %1069 = vmatpush1.msra.mxu0 %v443
    %1070 = vmatprep.subr.mxu0 %v451
    %1071 = vmatpush1.msra.mxu0 %v450
    %1072 = vmatprep.subr.mxu0 %v458
    %1073 = vmatpush1.msra.mxu0 %v457
    %1074 = vmatprep.subr.mxu0 %v465
    %1075 = vmatpush1.msra.mxu0 %v464
    %1076 = vmatprep.subr.mxu0 %v472
    %1077 = vmatpush1.msra.mxu0 %v471
    %1078 = vmatprep.subr.mxu0 %v479
    %1079 = vmatpush1.msra.mxu0 %v478
    %1080 = vmatprep.subr.mxu0 %v486
    %1081 = vmatpush1.msra.mxu0 %v485
    %1082 = vmatprep.subr.mxu0 %v493
    %1083 = vmatpush1.msra.mxu0 %v492
    %1084 = vmatprep.subr.mxu0 %v500
    %1085 = vmatpush1.msra.mxu0 %v499
    %1086 = vmatprep.subr.mxu0 %v507
    %1087 = vmatpush1.msra.mxu0 %v506
    %1088 = vmatprep.subr.mxu0 %v514
    %1089 = vmatpush1.msra.mxu0 %v513
    %1090 = vmatprep.subr.mxu0 %v521
    %1091 = vmatpush1.msra.mxu0 %v520
    %1092 = vmatprep.subr.mxu0 %v528
    %1093 = vmatpush1.msra.mxu0 %v527
    %1094 = vmatprep.subr.mxu0 %v535
    %1095 = vmatpush1.msra.mxu0 %v534
    %1096 = vmatprep.subr.mxu0 %v542
    %1097 = vmatpush1.msra.mxu0 %v541
    %1098 = vmatprep.subr.mxu0 %v549
    %1099 = vmatpush1.msra.mxu0 %v548
    %1100 = vmatprep.subr.mxu0 %v556
    %1101 = vmatpush1.msra.mxu0 %v555
    %1102 = vmatprep.subr.mxu0 %v563
    %1103 = vmatpush1.msra.mxu0 %v562
    %1104 = vmatprep.subr.mxu0 %v570
    %1105 = vmatpush1.msra.mxu0 %v569
    %1106 = vmatprep.subr.mxu0 %v577
    %1107 = vmatpush1.msra.mxu0 %v576
    %1108 = vmatprep.subr.mxu0 %v584
    %1109 = vmatpush1.msra.mxu0 %v583
    %1110 = vmatprep.subr.mxu0 %v591
    %1111 = vmatpush1.msra.mxu0 %v590
    %1112 = vmatprep.subr.mxu0 %v598
    %1113 = vmatpush1.msra.mxu0 %v597
    %1114 = vmatprep.subr.mxu0 %v605
    %1115 = vmatpush1.msra.mxu0 %v604
    %1116 = vmatprep.subr.mxu0 %v612
    %1117 = vmatpush1.msra.mxu0 %v611
    %1118 = vmatprep.subr.mxu0 %v619
    %1119 = vmatpush1.msra.mxu0 %v618
    %1120 = vmatprep.subr.mxu0 %v626
    %1121 = vmatpush1.msra.mxu0 %v625
    %1122 = vmatprep.subr.mxu0 %v633
    %1123 = vmatpush1.msra.mxu0 %v632
    %1124 = vmatprep.subr.mxu0 %v640
    %1125 = vmatpush1.msra.mxu0 %v639
    %1126 = vmatprep.subr.mxu0 %v647
    %1127 = vmatpush1.msra.mxu0 %v646
    %1128 = vmatprep.subr.mxu0 %v654
    %1129 = vmatpush1.msra.mxu0 %v653
    %1130 = vmatprep.subr.mxu0 %v661
    %1131 = vmatpush1.msra.mxu0 %v660
    %1132 = vmatprep.mubr.f32.mxu0 %v438
    %1133 = vmatmul.mubr.f32.gmra.mrb[0].mxu0 %v437
    %v1134 = vpop.f32.mrb[0].mxu0
    %v1135 = vadd.f32 %v902, %v1134
    %v1136 = vpop.f32.mrb[0].mxu0
    %v1137 = vadd.f32 %v906, %v1136
    %1138 = vdwg.mxu0
    %1139 = vmatprep.subr.mxu0 %v668
    %1140 = vmatpush1.msra.mxu0 %v667
    %1141 = vmatprep.subr.mxu0 %v675
    %1142 = vmatpush1.msra.mxu0 %v674
    %1143 = vmatprep.subr.mxu0 %v682
    %1144 = vmatpush1.msra.mxu0 %v681
    %1145 = vmatprep.subr.mxu0 %v689
    %1146 = vmatpush1.msra.mxu0 %v688
    %1147 = vmatprep.subr.mxu0 %v696
    %1148 = vmatpush1.msra.mxu0 %v695
    %1149 = vmatprep.subr.mxu0 %v703
    %1150 = vmatpush1.msra.mxu0 %v702
    %1151 = vmatprep.subr.mxu0 %v710
    %1152 = vmatpush1.msra.mxu0 %v709
    %1153 = vmatprep.subr.mxu0 %v717
    %1154 = vmatpush1.msra.mxu0 %v716
    %1155 = vmatprep.subr.mxu0 %v724
    %1156 = vmatpush1.msra.mxu0 %v723
    %1157 = vmatprep.subr.mxu0 %v731
    %1158 = vmatpush1.msra.mxu0 %v730
    %1159 = vmatprep.subr.mxu0 %v738
    %1160 = vmatpush1.msra.mxu0 %v737
    %1161 = vmatprep.subr.mxu0 %v745
    %1162 = vmatpush1.msra.mxu0 %v744
    %1163 = vmatprep.subr.mxu0 %v752
    %1164 = vmatpush1.msra.mxu0 %v751
    %1165 = vmatprep.subr.mxu0 %v759
    %1166 = vmatpush1.msra.mxu0 %v758
    %1167 = vmatprep.subr.mxu0 %v766
    %1168 = vmatpush1.msra.mxu0 %v765
    %1169 = vmatprep.subr.mxu0 %v773
    %1170 = vmatpush1.msra.mxu0 %v772
    %1171 = vmatprep.subr.mxu0 %v780
    %1172 = vmatpush1.msra.mxu0 %v779
    %1173 = vmatprep.subr.mxu0 %v787
    %1174 = vmatpush1.msra.mxu0 %v786
    %1175 = vmatprep.subr.mxu0 %v794
    %1176 = vmatpush1.msra.mxu0 %v793
    %1177 = vmatprep.subr.mxu0 %v801
    %1178 = vmatpush1.msra.mxu0 %v800
    %1179 = vmatprep.subr.mxu0 %v808
    %1180 = vmatpush1.msra.mxu0 %v807
    %1181 = vmatprep.subr.mxu0 %v815
    %1182 = vmatpush1.msra.mxu0 %v814
    %1183 = vmatprep.subr.mxu0 %v822
    %1184 = vmatpush1.msra.mxu0 %v821
    %1185 = vmatprep.subr.mxu0 %v829
    %1186 = vmatpush1.msra.mxu0 %v828
    %1187 = vmatprep.subr.mxu0 %v836
    %1188 = vmatpush1.msra.mxu0 %v835
    %1189 = vmatprep.subr.mxu0 %v843
    %1190 = vmatpush1.msra.mxu0 %v842
    %1191 = vmatprep.subr.mxu0 %v850
    %1192 = vmatpush1.msra.mxu0 %v849
    %1193 = vmatprep.subr.mxu0 %v857
    %1194 = vmatpush1.msra.mxu0 %v856
    %1195 = vmatprep.subr.mxu0 %v864
    %1196 = vmatpush1.msra.mxu0 %v863
    %1197 = vmatprep.subr.mxu0 %v871
    %1198 = vmatpush1.msra.mxu0 %v870
    %1199 = vmatprep.subr.mxu0 %v878
    %1200 = vmatpush1.msra.mxu0 %v877
    %1201 = vmatprep.subr.mxu0 %v885
    %1202 = vmatpush1.msra.mxu0 %v884
    %1203 = vmatprep.mubr.f32.mxu0 %v440
    %1204 = vmatmul.mubr.f32.gmra.mrb[0].mxu0 %v439
    %v1205 = vpop.f32.mrb[0].mxu0
    %v1206 = vadd.f32 %v1135, %v1205
    %v1207 = vpop.f32.mrb[0].mxu0
    %v1208 = vadd.f32 %v1137, %v1207
    %1209 = vdwg.mxu0
    %1210 = vmatprep.subr.mxu0 %v446
    %1211 = vmatpush1.msra.mxu0 %v445
    %1212 = vmatprep.subr.mxu0 %v453
    %1213 = vmatpush1.msra.mxu0 %v452
    %1214 = vmatprep.subr.mxu0 %v460
    %1215 = vmatpush1.msra.mxu0 %v459
    %1216 = vmatprep.subr.mxu0 %v467
    %1217 = vmatpush1.msra.mxu0 %v466
    %1218 = vmatprep.subr.mxu0 %v474
    %1219 = vmatpush1.msra.mxu0 %v473
    %1220 = vmatprep.subr.mxu0 %v481
    %1221 = vmatpush1.msra.mxu0 %v480
    %1222 = vmatprep.subr.mxu0 %v488
    %1223 = vmatpush1.msra.mxu0 %v487
    %1224 = vmatprep.subr.mxu0 %v495
    %1225 = vmatpush1.msra.mxu0 %v494
    %1226 = vmatprep.subr.mxu0 %v502
    %1227 = vmatpush1.msra.mxu0 %v501
    %1228 = vmatprep.subr.mxu0 %v509
    %1229 = vmatpush1.msra.mxu0 %v508
    %1230 = vmatprep.subr.mxu0 %v516
    %1231 = vmatpush1.msra.mxu0 %v515
    %1232 = vmatprep.subr.mxu0 %v523
    %1233 = vmatpush1.msra.mxu0 %v522
    %1234 = vmatprep.subr.mxu0 %v530
    %1235 = vmatpush1.msra.mxu0 %v529
    %1236 = vmatprep.subr.mxu0 %v537
    %1237 = vmatpush1.msra.mxu0 %v536
    %1238 = vmatprep.subr.mxu0 %v544
    %1239 = vmatpush1.msra.mxu0 %v543
    %1240 = vmatprep.subr.mxu0 %v551
    %1241 = vmatpush1.msra.mxu0 %v550
    %1242 = vmatprep.subr.mxu0 %v558
    %1243 = vmatpush1.msra.mxu0 %v557
    %1244 = vmatprep.subr.mxu0 %v565
    %1245 = vmatpush1.msra.mxu0 %v564
    %1246 = vmatprep.subr.mxu0 %v572
    %1247 = vmatpush1.msra.mxu0 %v571
    %1248 = vmatprep.subr.mxu0 %v579
    %1249 = vmatpush1.msra.mxu0 %v578
    %1250 = vmatprep.subr.mxu0 %v586
    %1251 = vmatpush1.msra.mxu0 %v585
    %1252 = vmatprep.subr.mxu0 %v593
    %1253 = vmatpush1.msra.mxu0 %v592
    %1254 = vmatprep.subr.mxu0 %v600
    %1255 = vmatpush1.msra.mxu0 %v599
    %1256 = vmatprep.subr.mxu0 %v607
    %1257 = vmatpush1.msra.mxu0 %v606
    %1258 = vmatprep.subr.mxu0 %v614
    %1259 = vmatpush1.msra.mxu0 %v613
    %1260 = vmatprep.subr.mxu0 %v621
    %1261 = vmatpush1.msra.mxu0 %v620
    %1262 = vmatprep.subr.mxu0 %v628
    %1263 = vmatpush1.msra.mxu0 %v627
    %1264 = vmatprep.subr.mxu0 %v635
    %1265 = vmatpush1.msra.mxu0 %v634
    %1266 = vmatprep.subr.mxu0 %v642
    %1267 = vmatpush1.msra.mxu0 %v641
    %1268 = vmatprep.subr.mxu0 %v649
    %1269 = vmatpush1.msra.mxu0 %v648
    %1270 = vmatprep.subr.mxu0 %v656
    %1271 = vmatpush1.msra.mxu0 %v655
    %1272 = vmatprep.subr.mxu0 %v663
    %1273 = vmatpush1.msra.mxu0 %v662
    %1274 = vmatprep.mubr.f32.mxu0 %v438
    %1275 = vmatmul.mubr.f32.gmra.mrb[0].mxu0 %v437
    %v1276 = vpop.f32.mrb[0].mxu0
    %v1277 = vadd.f32 %v910, %v1276
    %v1278 = vpop.f32.mrb[0].mxu0
    %v1279 = vadd.f32 %v914, %v1278
    %1280 = vdwg.mxu0
    %1281 = vmatprep.subr.mxu0 %v670
    %1282 = vmatpush1.msra.mxu0 %v669
    %1283 = vmatprep.subr.mxu0 %v677
    %1284 = vmatpush1.msra.mxu0 %v676
    %1285 = vmatprep.subr.mxu0 %v684
    %1286 = vmatpush1.msra.mxu0 %v683
    %1287 = vmatprep.subr.mxu0 %v691
    %1288 = vmatpush1.msra.mxu0 %v690
    %1289 = vmatprep.subr.mxu0 %v698
    %1290 = vmatpush1.msra.mxu0 %v697
    %1291 = vmatprep.subr.mxu0 %v705
    %1292 = vmatpush1.msra.mxu0 %v704
    %1293 = vmatprep.subr.mxu0 %v712
    %1294 = vmatpush1.msra.mxu0 %v711
    %1295 = vmatprep.subr.mxu0 %v719
    %1296 = vmatpush1.msra.mxu0 %v718
    %1297 = vmatprep.subr.mxu0 %v726
    %1298 = vmatpush1.msra.mxu0 %v725
    %1299 = vmatprep.subr.mxu0 %v733
    %1300 = vmatpush1.msra.mxu0 %v732
    %1301 = vmatprep.subr.mxu0 %v740
    %1302 = vmatpush1.msra.mxu0 %v739
    %1303 = vmatprep.subr.mxu0 %v747
    %1304 = vmatpush1.msra.mxu0 %v746
    %1305 = vmatprep.subr.mxu0 %v754
    %1306 = vmatpush1.msra.mxu0 %v753
    %1307 = vmatprep.subr.mxu0 %v761
    %1308 = vmatpush1.msra.mxu0 %v760
    %1309 = vmatprep.subr.mxu0 %v768
    %1310 = vmatpush1.msra.mxu0 %v767
    %1311 = vmatprep.subr.mxu0 %v775
    %1312 = vmatpush1.msra.mxu0 %v774
    %1313 = vmatprep.subr.mxu0 %v782
    %1314 = vmatpush1.msra.mxu0 %v781
    %1315 = vmatprep.subr.mxu0 %v789
    %1316 = vmatpush1.msra.mxu0 %v788
    %1317 = vmatprep.subr.mxu0 %v796
    %1318 = vmatpush1.msra.mxu0 %v795
    %1319 = vmatprep.subr.mxu0 %v803
    %1320 = vmatpush1.msra.mxu0 %v802
    %1321 = vmatprep.subr.mxu0 %v810
    %1322 = vmatpush1.msra.mxu0 %v809
    %1323 = vmatprep.subr.mxu0 %v817
    %1324 = vmatpush1.msra.mxu0 %v816
    %1325 = vmatprep.subr.mxu0 %v824
    %1326 = vmatpush1.msra.mxu0 %v823
    %1327 = vmatprep.subr.mxu0 %v831
    %1328 = vmatpush1.msra.mxu0 %v830
    %1329 = vmatprep.subr.mxu0 %v838
    %1330 = vmatpush1.msra.mxu0 %v837
    %1331 = vmatprep.subr.mxu0 %v845
    %1332 = vmatpush1.msra.mxu0 %v844
    %1333 = vmatprep.subr.mxu0 %v852
    %1334 = vmatpush1.msra.mxu0 %v851
    %1335 = vmatprep.subr.mxu0 %v859
    %1336 = vmatpush1.msra.mxu0 %v858
    %1337 = vmatprep.subr.mxu0 %v866
    %1338 = vmatpush1.msra.mxu0 %v865
    %1339 = vmatprep.subr.mxu0 %v873
    %1340 = vmatpush1.msra.mxu0 %v872
    %1341 = vmatprep.subr.mxu0 %v880
    %1342 = vmatpush1.msra.mxu0 %v879
    %1343 = vmatprep.subr.mxu0 %v887
    %1344 = vmatpush1.msra.mxu0 %v886
    %1345 = vmatprep.mubr.f32.mxu0 %v440
    %1346 = vmatmul.mubr.f32.gmra.mrb[0].mxu0 %v439
    %v1347 = vpop.f32.mrb[0].mxu0
    %v1348 = vadd.f32 %v1277, %v1347
    %v1349 = vpop.f32.mrb[0].mxu0
    %v1350 = vadd.f32 %v1279, %v1349
    %1351 = vdwg.mxu0
    %1352 = vmatprep.subr.mxu0 0.0
    %1353 = vmatpush1.msra.mxu0 %v447
    %1354 = vmatprep.subr.mxu0 0.0
    %1355 = vmatpush1.msra.mxu0 %v454
    %1356 = vmatprep.subr.mxu0 0.0
    %1357 = vmatpush1.msra.mxu0 %v461
    %1358 = vmatprep.subr.mxu0 0.0
    %1359 = vmatpush1.msra.mxu0 %v468
    %1360 = vmatprep.subr.mxu0 0.0
    %1361 = vmatpush1.msra.mxu0 %v475
    %1362 = vmatprep.subr.mxu0 0.0
    %1363 = vmatpush1.msra.mxu0 %v482
    %1364 = vmatprep.subr.mxu0 0.0
    %1365 = vmatpush1.msra.mxu0 %v489
    %1366 = vmatprep.subr.mxu0 0.0
    %1367 = vmatpush1.msra.mxu0 %v496
    %1368 = vmatprep.subr.mxu0 0.0
    %1369 = vmatpush1.msra.mxu0 %v503
    %1370 = vmatprep.subr.mxu0 0.0
    %1371 = vmatpush1.msra.mxu0 %v510
    %1372 = vmatprep.subr.mxu0 0.0
    %1373 = vmatpush1.msra.mxu0 %v517
    %1374 = vmatprep.subr.mxu0 0.0
    %1375 = vmatpush1.msra.mxu0 %v524
    %1376 = vmatprep.subr.mxu0 0.0
    %1377 = vmatpush1.msra.mxu0 %v531
    %1378 = vmatprep.subr.mxu0 0.0
    %1379 = vmatpush1.msra.mxu0 %v538
    %1380 = vmatprep.subr.mxu0 0.0
    %1381 = vmatpush1.msra.mxu0 %v545
    %1382 = vmatprep.subr.mxu0 0.0
    %1383 = vmatpush1.msra.mxu0 %v552
    %1384 = vmatprep.subr.mxu0 0.0
    %1385 = vmatpush1.msra.mxu0 %v559
    %1386 = vmatprep.subr.mxu0 0.0
    %1387 = vmatpush1.msra.mxu0 %v566
    %1388 = vmatprep.subr.mxu0 0.0
    %1389 = vmatpush1.msra.mxu0 %v573
    %1390 = vmatprep.subr.mxu0 0.0
    %1391 = vmatpush1.msra.mxu0 %v580
    %1392 = vmatprep.subr.mxu0 0.0
    %1393 = vmatpush1.msra.mxu0 %v587
    %1394 = vmatprep.subr.mxu0 0.0
    %1395 = vmatpush1.msra.mxu0 %v594
    %1396 = vmatprep.subr.mxu0 0.0
    %1397 = vmatpush1.msra.mxu0 %v601
    %1398 = vmatprep.subr.mxu0 0.0
    %1399 = vmatpush1.msra.mxu0 %v608
    %1400 = vmatprep.subr.mxu0 0.0
    %1401 = vmatpush1.msra.mxu0 %v615
    %1402 = vmatprep.subr.mxu0 0.0
    %1403 = vmatpush1.msra.mxu0 %v622
    %1404 = vmatprep.subr.mxu0 0.0
    %1405 = vmatpush1.msra.mxu0 %v629
    %1406 = vmatprep.subr.mxu0 0.0
    %1407 = vmatpush1.msra.mxu0 %v636
    %1408 = vmatprep.subr.mxu0 0.0
    %1409 = vmatpush1.msra.mxu0 %v643
    %1410 = vmatprep.subr.mxu0 0.0
    %1411 = vmatpush1.msra.mxu0 %v650
    %1412 = vmatprep.subr.mxu0 0.0
    %1413 = vmatpush1.msra.mxu0 %v657
    %1414 = vmatprep.subr.mxu0 0.0
    %1415 = vmatpush1.msra.mxu0 %v664
    %1416 = vmatprep.mubr.f32.mxu0 %v438
    %1417 = vmatmul.mubr.f32.gmra.mrb[0].mxu0 %v437
    %v1418 = vpop.f32.mrb[0].mxu0
    %v1419 = vadd.f32 %v918, %v1418
    %v1420 = vpop.f32.mrb[0].mxu0
    %1421 = vdwg.mxu0
    %1422 = vmatprep.subr.mxu0 0.0
    %1423 = vmatpush1.msra.mxu0 %v671
    %1424 = vmatprep.subr.mxu0 0.0
    %1425 = vmatpush1.msra.mxu0 %v678
    %1426 = vmatprep.subr.mxu0 0.0
    %1427 = vmatpush1.msra.mxu0 %v685
    %1428 = vmatprep.subr.mxu0 0.0
    %1429 = vmatpush1.msra.mxu0 %v692
    %1430 = vmatprep.subr.mxu0 0.0
    %1431 = vmatpush1.msra.mxu0 %v699
    %1432 = vmatprep.subr.mxu0 0.0
    %1433 = vmatpush1.msra.mxu0 %v706
    %1434 = vmatprep.subr.mxu0 0.0
    %1435 = vmatpush1.msra.mxu0 %v713
    %1436 = vmatprep.subr.mxu0 0.0
    %1437 = vmatpush1.msra.mxu0 %v720
    %1438 = vmatprep.subr.mxu0 0.0
    %1439 = vmatpush1.msra.mxu0 %v727
    %1440 = vmatprep.subr.mxu0 0.0
    %1441 = vmatpush1.msra.mxu0 %v734
    %1442 = vmatprep.subr.mxu0 0.0
    %1443 = vmatpush1.msra.mxu0 %v741
    %1444 = vmatprep.subr.mxu0 0.0
    %1445 = vmatpush1.msra.mxu0 %v748
    %1446 = vmatprep.subr.mxu0 0.0
    %1447 = vmatpush1.msra.mxu0 %v755
    %1448 = vmatprep.subr.mxu0 0.0
    %1449 = vmatpush1.msra.mxu0 %v762
    %1450 = vmatprep.subr.mxu0 0.0
    %1451 = vmatpush1.msra.mxu0 %v769
    %1452 = vmatprep.subr.mxu0 0.0
    %1453 = vmatpush1.msra.mxu0 %v776
    %1454 = vmatprep.subr.mxu0 0.0
    %1455 = vmatpush1.msra.mxu0 %v783
    %1456 = vmatprep.subr.mxu0 0.0
    %1457 = vmatpush1.msra.mxu0 %v790
    %1458 = vmatprep.subr.mxu0 0.0
    %1459 = vmatpush1.msra.mxu0 %v797
    %1460 = vmatprep.subr.mxu0 0.0
    %1461 = vmatpush1.msra.mxu0 %v804
    %1462 = vmatprep.subr.mxu0 0.0
    %1463 = vmatpush1.msra.mxu0 %v811
    %1464 = vmatprep.subr.mxu0 0.0
    %1465 = vmatpush1.msra.mxu0 %v818
    %1466 = vmatprep.subr.mxu0 0.0
    %1467 = vmatpush1.msra.mxu0 %v825
    %1468 = vmatprep.subr.mxu0 0.0
    %1469 = vmatpush1.msra.mxu0 %v832
    %1470 = vmatprep.subr.mxu0 0.0
    %1471 = vmatpush1.msra.mxu0 %v839
    %1472 = vmatprep.subr.mxu0 0.0
    %1473 = vmatpush1.msra.mxu0 %v846
    %1474 = vmatprep.subr.mxu0 0.0
    %1475 = vmatpush1.msra.mxu0 %v853
    %1476 = vmatprep.subr.mxu0 0.0
    %1477 = vmatpush1.msra.mxu0 %v860
    %1478 = vmatprep.subr.mxu0 0.0
    %1479 = vmatpush1.msra.mxu0 %v867
    %1480 = vmatprep.subr.mxu0 0.0
    %1481 = vmatpush1.msra.mxu0 %v874
    %1482 = vmatprep.subr.mxu0 0.0
    %1483 = vmatpush1.msra.mxu0 %v881
    %1484 = vmatprep.subr.mxu0 0.0
    %1485 = vmatpush1.msra.mxu0 %v888
    %1486 = vmatprep.mubr.f32.mxu0 %v440
    %1487 = vmatmul.mubr.f32.gmra.mrb[0].mxu0 %v439
    %v1488 = vpop.f32.mrb[0].mxu0
    %v1489 = vadd.f32 %v1419, %v1488
    %v1490 = vpop.f32.mrb[0].mxu0
    %1491 = vdwg.mxu0
    %v1492 = vtanh.pop %v1064
    %v1493 = vtanh.pop %v1066
    %v1494 = vtanh.pop %v1206
    %v1495 = vtanh.pop %v1208
    %v1496 = vtanh.pop %v1348
    %v1497 = vtanh.pop %v1350
    %v1498 = vtanh.pop %v1489
    %1499 = vst [vmem:[#allocation2] sm:$0xff] %v1492
    %1500 = vst [vmem:[#allocation2 + $0x8] sm:$0xff] %v1493
    %1501 = vst [vmem:[#allocation2 + $0x10] sm:$0xff] %v1494
    %1502 = vst [vmem:[#allocation2 + $0x18] sm:$0xff] %v1495
    %1503 = vst [vmem:[#allocation2 + $0x20] sm:$0xff] %v1496
    %1504 = vst [vmem:[#allocation2 + $0x28] sm:$0xff] %v1497
    %vm1505 = vcmask 130048
    %1506 = vst.msk [vmem:[#allocation2 + $0x30] sm:$0xff] %vm1505, %v1498
    // Predicated region
    $region30: #{tpu_custom_call.1} parent=1 // pred_check
      _
    $region31: #{tpu_custom_call.1} parent=1 // pred_check_branch
      %1508 = sbr.rel (0) target = $region33
    $region32: #{tpu_custom_call.1} parent=1 // pred_region
      %s1510 = ssub.s32 896, 896
      %1511 = vsyncadd [#allocation3], %s1510
      %s1513 = sshll.u32 [#allocation2], 4
      %s1514 = int_to_ptr.vmem [resolvable:$true] %s1513
      %1516 = dma.vmem_to_hbm [thread:$0]  %s1514, 896, %s7, [#allocation3]
    $region33: #{tpu_custom_call.1} parent=1 // pred_fallthru
      _
    // Predicated region
    $region34: #{tpu_custom_call.1} parent=1 // pred_check
      _
    $region35: #{tpu_custom_call.1} parent=1 // pred_check_branch
      %1518 = sbr.rel (0) target = $region37
    $region36: #{tpu_custom_call.1} parent=1 // pred_region
      %1519 = dma.done [#allocation3], 896
    $region37: #{tpu_custom_call.1} parent=1 // pred_fallthru
      _
    %1520 = vsyncpa [#allocation3], 1

</llo_original>
